<compile_context>
chip_gen: v7x
topology: tpu7x:2x2x1
jax: 0.10.0
libtpu: 0.0.40
codegen_flags: <defaults>
</compile_context>

<pallas_src>
import math
from functools import partial

import jax
import jax.numpy as jnp
from jax.experimental import pallas as pl
from jax.experimental.pallas import tpu as pltpu

NUM_CLASSES = 964
HIDDEN = 512
OUT_DIM = 1024


def _round_up(x, m):
    return (x + m - 1) // m * m


def _issue_row_gather(t_sm, w1_hbm, rows_ref, sem, base, slot, TB):
    """Start TB single-row DMAs: W1[t[base + j]] -> rows_ref[slot*TB + j]."""
    @pl.loop(0, TB)
    def _(j):
        cls = jnp.clip(t_sm[base + j], 0, NUM_CLASSES - 1)  # guard OOB indices
        pltpu.make_async_copy(
            w1_hbm.at[pl.ds(cls, 1), :],
            rows_ref.at[pl.ds(slot * TB + j, 1), :],
            sem.at[slot],
        ).start()


def _wait_row_gather(w1_hbm, rows_ref, sem, slot, TB):
    """Wait for the TB row copies of buffer `slot` (shared sem, one wait/copy)."""
    @pl.loop(0, TB)
    def _(j):
        pltpu.make_async_copy(
            w1_hbm.at[pl.ds(0, 1), :],                       # same-shape descriptor
            rows_ref.at[pl.ds(slot * TB + j, 1), :],
            sem.at[slot],
        ).wait()


def _cond_z_t_kernel(TB,          # static batch-tile size (bound via partial)
                     t_sm,        # (B_pad,) int32, SMEM (scalar prefetch)
                     w1_hbm,      # (964, 512)  f32, stays in HBM (pl.ANY)
                     b1_ref,      # (1, 512)    f32, VMEM
                     w2_ref,      # (512, 512)  bf16, VMEM (resident across grid)
                     b2_ref,      # (1, 512)    f32, VMEM
                     w3_ref,      # (512, 1024) bf16, VMEM (resident across grid)
                     b3_ref,      # (1, 1024)   f32, VMEM
                     o_ref,       # (TB, 1024)  f32, VMEM output tile
                     rows_ref,    # (2*TB, 512) f32, VMEM: double-buffered W1 rows
                     sem):        # (2,) shared DMA semaphores (one per slot)
    c = pl.program_id(0)            # "parallel" batch-chunk axis (megacore split)
    r = pl.program_id(1)            # "arbitrary" sequential tile axis
    n_inner = pl.num_programs(1)
    tile = c * n_inner + r
    slot = r % 2
    nxt = 1 - slot

    # Prime the pipeline: the first tile of each chunk gathers its own rows.
    @pl.when(r == 0)
    def _():
        _issue_row_gather(t_sm, w1_hbm, rows_ref, sem, tile * TB, slot, TB)

    # Prefetch the NEXT tile's W1 rows into the other slot *before* waiting on
    # the current tile's DMAs (keeps SMEM index reads ahead of the waits and
    # hides the gather latency under this tile's matmuls / output writeback).
    @pl.when(r + 1 < n_inner)
    def _():
        _issue_row_gather(t_sm, w1_hbm, rows_ref, sem, (tile + 1) * TB, nxt, TB)

    # Wait for the current tile's TB row copies.
    _wait_row_gather(w1_hbm, rows_ref, sem, slot, TB)

    off = pl.multiple_of(slot * TB, TB)
    rows = rows_ref[pl.ds(off, TB), :]                              # (TB, 512) f32

    # Layer 1: gathered one-hot matmul + bias + ReLU.
    h1 = jnp.maximum(rows + b1_ref[...], 0.0)

    # Layer 2: Linear(512, 512) + ReLU  (bf16 x bf16 -> f32 on the MXU).
    h2 = jnp.dot(h1.astype(jnp.bfloat16), w2_ref[...],
                 preferred_element_type=jnp.float32) + b2_ref[...]
    h2 = jnp.maximum(h2, 0.0)

    # Layer 3: Linear(512, 1024).
    o_ref[...] = jnp.dot(h2.astype(jnp.bfloat16), w3_ref[...],
                         preferred_element_type=jnp.float32) + b3_ref[...]


def _pick_tile(B, block_b):
    if block_b is not None:
        return max(8, min(_round_up(block_b, 8), _round_up(B, 8)))
    # v6e/v7x MXUs are 256 wide: a 256-row tile fills the systolic array and
    # halves the number of grid steps; v5e (128-wide MXU) keeps 128.
    cap = 256
    try:
        kind = jax.devices()[0].device_kind.lower()
        if any(v in kind for v in ("v2", "v3", "v4", "v5")):
            cap = 128
    except Exception:
        pass
    return min(cap, _round_up(B, 8))


def cond_z_t_forward(t, params, block_b=None):
    """t: int array of shape (B,), values in [0, 964). Returns (B, 1024) float32."""
    (w1, b1), (w2, b2), (w3, b3) = params
    B = t.shape[0]

    TB = _pick_tile(B, block_b)
    n_tiles = -(-B // TB)
    # Only split batch tiles across the two v7x TensorCores when there are
    # enough tiles for each core's private resident-weight DMA to amortize.
    n_split = 2 if n_tiles >= 4 else 1
    n_tiles = _round_up(n_tiles, n_split)
    n_inner = n_tiles // n_split
    B_pad = n_tiles * TB

    t_pad = jnp.zeros((B_pad,), jnp.int32).at[:B].set(t.astype(jnp.int32))

    w1f = w1.astype(jnp.float32)          # only the gathered rows are read -> keep f32
    w2b = w2.astype(jnp.bfloat16)         # bulk weights in bf16 (HBM-bound kernel)
    w3b = w3.astype(jnp.bfloat16)
    b1r = b1.reshape(1, HIDDEN).astype(jnp.float32)
    b2r = b2.reshape(1, HIDDEN).astype(jnp.float32)
    b3r = b3.reshape(1, OUT_DIM).astype(jnp.float32)

    const2d = lambda c, r, t_sm: (0, 0)                 # weights/biases: VMEM-resident
    out_map = lambda c, r, t_sm: (c * n_inner + r, 0)   # flat batch-tile index

    # TODO(synk): optional large-B path keeping W1 VMEM-resident (feedback item 8)
    # and pl.Buffered(1) single-buffering of the resident weights were skipped.

    out = pl.pallas_call(
        partial(_cond_z_t_kernel, TB),
        out_shape=jax.ShapeDtypeStruct((B_pad, OUT_DIM), jnp.float32),
        grid_spec=pltpu.PrefetchScalarGridSpec(
            num_scalar_prefetch=1,
            grid=(n_split, n_inner),
            in_specs=[
                pl.BlockSpec(memory_space=pl.ANY),          # W1 stays in HBM
                pl.BlockSpec((1, HIDDEN), const2d),         # b1
                pl.BlockSpec((HIDDEN, HIDDEN), const2d),    # W2 (bf16)
                pl.BlockSpec((1, HIDDEN), const2d),         # b2
                pl.BlockSpec((HIDDEN, OUT_DIM), const2d),   # W3 (bf16)
                pl.BlockSpec((1, OUT_DIM), const2d),        # b3
            ],
            out_specs=pl.BlockSpec((TB, OUT_DIM), out_map),
            scratch_shapes=[
                pltpu.VMEM((2 * TB, HIDDEN), jnp.float32),  # double-buffered W1 rows
                pltpu.SemaphoreType.DMA((2,)),              # one shared sem per slot
            ],
        ),
        compiler_params=pltpu.CompilerParams(
            # Inner tile axis must be sequential ("arbitrary") so the cross-step
            # gather prefetch is legal; the outer chunk axis carries megacore.
            dimension_semantics=("parallel", "arbitrary"),
            vmem_limit_bytes=32 << 20,   # actual footprint ~4-7 MiB at TB=256
        ),
    )(t_pad, w1f, b1r, w2b, b2r, w3b, b3r)

    return out[:B]


def init_params(key):
    """Deterministic init mimicking nn.Linear default (uniform +-1/sqrt(fan_in)).
    Weights are stored as (in, out)."""
    def linear(key, fan_in, fan_out):
        kw, kb = jax.random.split(key)
        bound = 1.0 / math.sqrt(fan_in)
        w = jax.random.uniform(kw, (fan_in, fan_out), jnp.float32, -bound, bound)
        b = jax.random.uniform(kb, (1, fan_out), jnp.float32, -bound, bound)
        return w, b

    k1, k2, k3 = jax.random.split(key, 3)
    return (
        linear(k1, NUM_CLASSES, HIDDEN),
        linear(k2, HIDDEN, HIDDEN),
        linear(k3, HIDDEN, OUT_DIM),
    )


def reference_forward(t, params):
    """Pure-JAX reference with the same dtype choices the kernel makes (f32 W1,
    bf16 W2/W3, f32 accumulate). one_hot(t) @ W1 is exactly a row gather of W1,
    so jnp.take reproduces it bit-for-bit."""
    (w1, b1), (w2, b2), (w3, b3) = params
    w1f = w1.astype(jnp.float32)
    w2b = w2.astype(jnp.bfloat16)
    w3b = w3.astype(jnp.bfloat16)
    ti = jnp.clip(t.astype(jnp.int32), 0, NUM_CLASSES - 1)
    h1 = jnp.maximum(jnp.take(w1f, ti, axis=0) + b1.reshape(1, -1), 0.0)
    h2 = jnp.maximum(
        jnp.dot(h1.astype(jnp.bfloat16), w2b,
                preferred_element_type=jnp.float32) + b2.reshape(1, -1), 0.0)
    return jnp.dot(h2.astype(jnp.bfloat16), w3b,
                   preferred_element_type=jnp.float32) + b3.reshape(1, -1)


if __name__ == "__main__":
    key = jax.random.PRNGKey(0)
    kp, kt = jax.random.split(key)

    params = init_params(kp)
    B = 8
    t = jax.random.randint(kt, (B,), 0, NUM_CLASSES, dtype=jnp.int32)

    out = jax.block_until_ready(cond_z_t_forward(t, params))
    ref = reference_forward(t, params)

    assert out.shape == (B, OUT_DIM) and out.dtype == jnp.float32
    max_err = float(jnp.max(jnp.abs(out - ref)))
    assert jnp.allclose(out, ref, atol=2e-3, rtol=2e-3), max_err

    print("KERNEL_OK")
</pallas_src>

<mosaic_0001>
module attributes {stable_mosaic.version = 11 : i64} {
  func.func @_cond_z_t_kernel(%arg0: i32, %arg1: i32, %arg2: memref<8xi32, #tpu.memory_space<smem>>, %arg3: memref<964x512xf32, #tpu.memory_space<any>>, %arg4: memref<1x512xf32, #tpu.memory_space<vmem>>, %arg5: memref<512x512xbf16, #tpu.memory_space<vmem>>, %arg6: memref<1x512xf32, #tpu.memory_space<vmem>>, %arg7: memref<512x1024xbf16, #tpu.memory_space<vmem>>, %arg8: memref<1x1024xf32, #tpu.memory_space<vmem>>, %arg9: memref<8x1024xf32, #tpu.memory_space<vmem>>, %arg10: memref<16x512xf32, #tpu.memory_space<vmem>>, %arg11: memref<2x!tpu.dma_semaphore, #tpu.memory_space<semaphore_mem>>) attributes {dimension_semantics = [#tpu.dimension_semantics<parallel>, #tpu.dimension_semantics<arbitrary>], iteration_bounds = array<i64: 1, 1>, scalar_prefetch = 1 : i64, scratch_operands = 2 : i64, tpu.core_type = #tpu.core_type<tc>, window_params = [{}, {pipeline_mode = #tpu.pipeline_mode<synchronous>, transform_indices = @transform_1, window_bounds = array<i64: 1, 512>}, {pipeline_mode = #tpu.pipeline_mode<synchronous>, transform_indices = @transform_2, window_bounds = array<i64: 512, 512>}, {pipeline_mode = #tpu.pipeline_mode<synchronous>, transform_indices = @transform_3, window_bounds = array<i64: 1, 512>}, {pipeline_mode = #tpu.pipeline_mode<synchronous>, transform_indices = @transform_4, window_bounds = array<i64: 512, 1024>}, {pipeline_mode = #tpu.pipeline_mode<synchronous>, transform_indices = @transform_5, window_bounds = array<i64: 1, 1024>}, {transform_indices = @transform_6, window_bounds = array<i64: 8, 1024>}]} {
    %c1_i32 = arith.constant 1 : i32
    %0 = arith.muli %arg0, %c1_i32 : i32
    %1 = arith.addi %0, %arg1 : i32
    %c2_i32 = arith.constant 2 : i32
    %c0_i32 = arith.constant 0 : i32
    %2 = arith.cmpi eq, %c2_i32, %c0_i32 : i32
    %c1_i32_0 = arith.constant 1 : i32
    %3 = arith.select %2, %c1_i32_0, %c2_i32 : i32
    %4 = arith.remsi %arg1, %3 : i32
    %c0_i32_1 = arith.constant 0 : i32
    %5 = arith.cmpi ne, %4, %c0_i32_1 : i32
    %c0_i32_2 = arith.constant 0 : i32
    %6 = arith.cmpi slt, %4, %c0_i32_2 : i32
    %c0_i32_3 = arith.constant 0 : i32
    %7 = arith.cmpi slt, %3, %c0_i32_3 : i32
    %8 = arith.xori %6, %7 : i1
    %9 = arith.andi %8, %5 : i1
    %10 = arith.addi %4, %3 : i32
    %11 = arith.select %9, %10, %4 : i32
    %c1_i32_4 = arith.constant 1 : i32
    %12 = arith.subi %c1_i32_4, %11 : i32
    %c0_i32_5 = arith.constant 0 : i32
    %13 = arith.cmpi eq, %arg1, %c0_i32_5 : i32
    %14 = arith.extui %13 : i1 to i32
    %c0_i32_6 = arith.constant 0 : i32
    %15 = arith.cmpi ne, %14, %c0_i32_6 : i32
    scf.if %15 {
      %c8_i32_29 = arith.constant 8 : i32
      %45 = arith.muli %1, %c8_i32_29 : i32
      %c0_i32_30 = arith.constant 0 : i32
      %c8_i32_31 = arith.constant 8 : i32
      %46 = arith.addi %c0_i32_30, %c8_i32_31 : i32
      %c1_i32_32 = arith.constant 1 : i32
      scf.for %arg12 = %c0_i32_30 to %46 step %c1_i32_32  : i32 {
        %c1_i32_34 = arith.constant 1 : i32
        %47 = arith.muli %arg12, %c1_i32_34 : i32
        %c0_i32_35 = arith.constant 0 : i32
        %48 = arith.addi %c0_i32_35, %47 : i32
        %49 = arith.addi %45, %48 : i32
        %50 = arith.index_cast %49 : i32 to index
        %51 = memref.load %arg2[%50] : memref<8xi32, #tpu.memory_space<smem>>
        %c0_i32_36 = arith.constant 0 : i32
        %c963_i32 = arith.constant 963 : i32
        %52 = arith.maxsi %c0_i32_36, %51 : i32
        %53 = arith.minsi %c963_i32, %52 : i32
        %c8_i32_37 = arith.constant 8 : i32
        %54 = arith.muli %11, %c8_i32_37 : i32
        %55 = arith.addi %54, %48 : i32
        %c0_i32_38 = arith.constant 0 : i32
        %56 = tpu.memref_slice %arg3[%53, %c0_i32_38] : memref<964x512xf32, #tpu.memory_space<any>> -> memref<1x512xf32, #tpu.memory_space<any>>
        %c0_i32_39 = arith.constant 0 : i32
        %57 = tpu.memref_slice %arg10[%55, %c0_i32_39] : memref<16x512xf32, #tpu.memory_space<vmem>> -> memref<1x512xf32, #tpu.memory_space<vmem>>
        %58 = tpu.memref_slice %arg11[%11] : memref<2x!tpu.dma_semaphore, #tpu.memory_space<semaphore_mem>> -> memref<1x!tpu.dma_semaphore, #tpu.memory_space<semaphore_mem>>
        %59 = tpu.memref_squeeze %58 : memref<1x!tpu.dma_semaphore, #tpu.memory_space<semaphore_mem>> -> memref<!tpu.dma_semaphore, #tpu.memory_space<semaphore_mem>>
        tpu.enqueue_dma source(%56 : memref<1x512xf32, #tpu.memory_space<any>>) target(%57 : memref<1x512xf32, #tpu.memory_space<vmem>>) target_semaphore(%59 : memref<!tpu.dma_semaphore, #tpu.memory_space<semaphore_mem>>)
      }
      %c8_i32_33 = arith.constant 8 : i32
    } else {
    }
    %c1_i32_7 = arith.constant 1 : i32
    %16 = arith.addi %arg1, %c1_i32_7 : i32
    %c1_i32_8 = arith.constant 1 : i32
    %17 = arith.cmpi slt, %16, %c1_i32_8 : i32
    %18 = arith.extui %17 : i1 to i32
    %c0_i32_9 = arith.constant 0 : i32
    %19 = arith.cmpi ne, %18, %c0_i32_9 : i32
    scf.if %19 {
      %c1_i32_29 = arith.constant 1 : i32
      %45 = arith.addi %1, %c1_i32_29 : i32
      %c8_i32_30 = arith.constant 8 : i32
      %46 = arith.muli %45, %c8_i32_30 : i32
      %c0_i32_31 = arith.constant 0 : i32
      %c8_i32_32 = arith.constant 8 : i32
      %47 = arith.addi %c0_i32_31, %c8_i32_32 : i32
      %c1_i32_33 = arith.constant 1 : i32
      scf.for %arg12 = %c0_i32_31 to %47 step %c1_i32_33  : i32 {
        %c1_i32_35 = arith.constant 1 : i32
        %48 = arith.muli %arg12, %c1_i32_35 : i32
        %c0_i32_36 = arith.constant 0 : i32
        %49 = arith.addi %c0_i32_36, %48 : i32
        %50 = arith.addi %46, %49 : i32
        %51 = arith.index_cast %50 : i32 to index
        %52 = memref.load %arg2[%51] : memref<8xi32, #tpu.memory_space<smem>>
        %c0_i32_37 = arith.constant 0 : i32
        %c963_i32 = arith.constant 963 : i32
        %53 = arith.maxsi %c0_i32_37, %52 : i32
        %54 = arith.minsi %c963_i32, %53 : i32
        %c8_i32_38 = arith.constant 8 : i32
        %55 = arith.muli %12, %c8_i32_38 : i32
        %56 = arith.addi %55, %49 : i32
        %c0_i32_39 = arith.constant 0 : i32
        %57 = tpu.memref_slice %arg3[%54, %c0_i32_39] : memref<964x512xf32, #tpu.memory_space<any>> -> memref<1x512xf32, #tpu.memory_space<any>>
        %c0_i32_40 = arith.constant 0 : i32
        %58 = tpu.memref_slice %arg10[%56, %c0_i32_40] : memref<16x512xf32, #tpu.memory_space<vmem>> -> memref<1x512xf32, #tpu.memory_space<vmem>>
        %59 = tpu.memref_slice %arg11[%12] : memref<2x!tpu.dma_semaphore, #tpu.memory_space<semaphore_mem>> -> memref<1x!tpu.dma_semaphore, #tpu.memory_space<semaphore_mem>>
        %60 = tpu.memref_squeeze %59 : memref<1x!tpu.dma_semaphore, #tpu.memory_space<semaphore_mem>> -> memref<!tpu.dma_semaphore, #tpu.memory_space<semaphore_mem>>
        tpu.enqueue_dma source(%57 : memref<1x512xf32, #tpu.memory_space<any>>) target(%58 : memref<1x512xf32, #tpu.memory_space<vmem>>) target_semaphore(%60 : memref<!tpu.dma_semaphore, #tpu.memory_space<semaphore_mem>>)
      }
      %c8_i32_34 = arith.constant 8 : i32
    } else {
    }
    %c0_i32_10 = arith.constant 0 : i32
    %c8_i32 = arith.constant 8 : i32
    %20 = arith.addi %c0_i32_10, %c8_i32 : i32
    %c1_i32_11 = arith.constant 1 : i32
    scf.for %arg12 = %c0_i32_10 to %20 step %c1_i32_11  : i32 {
      %c1_i32_29 = arith.constant 1 : i32
      %45 = arith.muli %arg12, %c1_i32_29 : i32
      %c0_i32_30 = arith.constant 0 : i32
      %46 = arith.addi %c0_i32_30, %45 : i32
      %c8_i32_31 = arith.constant 8 : i32
      %47 = arith.muli %11, %c8_i32_31 : i32
      %48 = arith.addi %47, %46 : i32
      %c0_i32_32 = arith.constant 0 : i32
      %c0_i32_33 = arith.constant 0 : i32
      %49 = tpu.memref_slice %arg3[%c0_i32_32, %c0_i32_33] : memref<964x512xf32, #tpu.memory_space<any>> -> memref<1x512xf32, #tpu.memory_space<any>>
      %c0_i32_34 = arith.constant 0 : i32
      %50 = tpu.memref_slice %arg10[%48, %c0_i32_34] : memref<16x512xf32, #tpu.memory_space<vmem>> -> memref<1x512xf32, #tpu.memory_space<vmem>>
      %51 = tpu.memref_slice %arg11[%11] : memref<2x!tpu.dma_semaphore, #tpu.memory_space<semaphore_mem>> -> memref<1x!tpu.dma_semaphore, #tpu.memory_space<semaphore_mem>>
      %52 = tpu.memref_squeeze %51 : memref<1x!tpu.dma_semaphore, #tpu.memory_space<semaphore_mem>> -> memref<!tpu.dma_semaphore, #tpu.memory_space<semaphore_mem>>
      tpu.wait_dma2 semaphore(%52 : memref<!tpu.dma_semaphore, #tpu.memory_space<semaphore_mem>>) src(%49 : memref<1x512xf32, #tpu.memory_space<any>>) dst(%50 : memref<1x512xf32, #tpu.memory_space<vmem>>)
    }
    %c8_i32_12 = arith.constant 8 : i32
    %c8_i32_13 = arith.constant 8 : i32
    %21 = arith.muli %11, %c8_i32_13 : i32
    %22 = tpu.assume_multiple %21, 8 : i32
    %23 = arith.index_cast %22 : i32 to index
    %c0 = arith.constant 0 : index
    %24 = vector.load %arg10[%23, %c0] : memref<16x512xf32, #tpu.memory_space<vmem>>, vector<8x512xf32>
    %c0_14 = arith.constant 0 : index
    %c0_15 = arith.constant 0 : index
    %25 = vector.load %arg4[%c0_14, %c0_15] : memref<1x512xf32, #tpu.memory_space<vmem>>, vector<1x512xf32>
    %26 = vector.broadcast %25 : vector<1x512xf32> to vector<8x512xf32>
    %27 = arith.addf %24, %26 : vector<8x512xf32>
    %cst = arith.constant 0.000000e+00 : f32
    %28 = vector.broadcast %cst : f32 to vector<8x512xf32>
    %29 = arith.maximumf %27, %28 : vector<8x512xf32>
    %30 = arith.truncf %29 : vector<8x512xf32> to vector<8x512xbf16>
    %c0_16 = arith.constant 0 : index
    %c0_17 = arith.constant 0 : index
    %31 = vector.load %arg5[%c0_16, %c0_17] : memref<512x512xbf16, #tpu.memory_space<vmem>>, vector<512x512xbf16>
    %cst_18 = arith.constant dense<0.000000e+00> : vector<8x512xf32>
    %32 = tpu.matmul %30, %31, %cst_18 {dimension_numbers = #tpu.dot_dimension_numbers<[1], [0], [0], [1], [0, 0, 1, 1], [], []>} : vector<8x512xbf16>, vector<512x512xbf16>, vector<8x512xf32> -> vector<8x512xf32>
    %c0_19 = arith.constant 0 : index
    %c0_20 = arith.constant 0 : index
    %33 = vector.load %arg6[%c0_19, %c0_20] : memref<1x512xf32, #tpu.memory_space<vmem>>, vector<1x512xf32>
    %34 = vector.broadcast %33 : vector<1x512xf32> to vector<8x512xf32>
    %35 = arith.addf %32, %34 : vector<8x512xf32>
    %cst_21 = arith.constant 0.000000e+00 : f32
    %36 = vector.broadcast %cst_21 : f32 to vector<8x512xf32>
    %37 = arith.maximumf %35, %36 : vector<8x512xf32>
    %38 = arith.truncf %37 : vector<8x512xf32> to vector<8x512xbf16>
    %c0_22 = arith.constant 0 : index
    %c0_23 = arith.constant 0 : index
    %39 = vector.load %arg7[%c0_22, %c0_23] : memref<512x1024xbf16, #tpu.memory_space<vmem>>, vector<512x1024xbf16>
    %cst_24 = arith.constant dense<0.000000e+00> : vector<8x1024xf32>
    %40 = tpu.matmul %38, %39, %cst_24 {dimension_numbers = #tpu.dot_dimension_numbers<[1], [0], [0], [1], [0, 0, 1, 1], [], []>} : vector<8x512xbf16>, vector<512x1024xbf16>, vector<8x1024xf32> -> vector<8x1024xf32>
    %c0_25 = arith.constant 0 : index
    %c0_26 = arith.constant 0 : index
    %41 = vector.load %arg8[%c0_25, %c0_26] : memref<1x1024xf32, #tpu.memory_space<vmem>>, vector<1x1024xf32>
    %42 = vector.broadcast %41 : vector<1x1024xf32> to vector<8x1024xf32>
    %43 = arith.addf %40, %42 : vector<8x1024xf32>
    %c0_27 = arith.constant 0 : index
    %c0_28 = arith.constant 0 : index
    %44 = vector.load %arg9[%c0_27, %c0_28] : memref<8x1024xf32, #tpu.memory_space<vmem>>, vector<8x1024xf32>
    tpu.vector_store %arg9[%c0_27, %c0_28], %43 {strides = array<i32>} : memref<8x1024xf32, #tpu.memory_space<vmem>>, vector<8x1024xf32>,
    return
  }
  func.func @transform_1(%arg0: i32, %arg1: i32, %arg2: memref<8xi32, #tpu.memory_space<smem>>) -> (i32, i32) {
    %c0_i32 = arith.constant 0 : i32
    %c0_i32_0 = arith.constant 0 : i32
    %c0_i32_1 = arith.constant 0 : i32
    return %c0_i32, %c0_i32_0 : i32, i32
  }
  func.func @transform_2(%arg0: i32, %arg1: i32, %arg2: memref<8xi32, #tpu.memory_space<smem>>) -> (i32, i32) {
    %c0_i32 = arith.constant 0 : i32
    %c0_i32_0 = arith.constant 0 : i32
    %c0_i32_1 = arith.constant 0 : i32
    return %c0_i32, %c0_i32_0 : i32, i32
  }
  func.func @transform_3(%arg0: i32, %arg1: i32, %arg2: memref<8xi32, #tpu.memory_space<smem>>) -> (i32, i32) {
    %c0_i32 = arith.constant 0 : i32
    %c0_i32_0 = arith.constant 0 : i32
    %c0_i32_1 = arith.constant 0 : i32
    return %c0_i32, %c0_i32_0 : i32, i32
  }
  func.func @transform_4(%arg0: i32, %arg1: i32, %arg2: memref<8xi32, #tpu.memory_space<smem>>) -> (i32, i32) {
    %c0_i32 = arith.constant 0 : i32
    %c0_i32_0 = arith.constant 0 : i32
    %c0_i32_1 = arith.constant 0 : i32
    return %c0_i32, %c0_i32_0 : i32, i32
  }
  func.func @transform_5(%arg0: i32, %arg1: i32, %arg2: memref<8xi32, #tpu.memory_space<smem>>) -> (i32, i32) {
    %c0_i32 = arith.constant 0 : i32
    %c0_i32_0 = arith.constant 0 : i32
    %c0_i32_1 = arith.constant 0 : i32
    return %c0_i32, %c0_i32_0 : i32, i32
  }
  func.func @transform_6(%arg0: i32, %arg1: i32, %arg2: memref<8xi32, #tpu.memory_space<smem>>) -> (i32, i32) {
    %c1_i32 = arith.constant 1 : i32
    %0 = arith.muli %arg0, %c1_i32 : i32
    %1 = arith.addi %0, %arg1 : i32
    %c0_i32 = arith.constant 0 : i32
    %c0_i32_0 = arith.constant 0 : i32
    return %1, %c0_i32 : i32, i32
  }
}

</mosaic_0001>

<llo_original>
// kernel: tpu_custom_call.1
$region0: #{tpu_custom_call.1}
  #allocation0 [shape = 'u32[]', space=smem, size = 0x4, offset = 0x4, fixed_abs, tag = 'smem constant byte address 0x4 - core index']
  #allocation1 [shape = 'u32[144,128]{1,0:T(1,128)}', space=vmem, size = 0x12000, scoped, tag = 'internal scratch']
  #allocation2 [shape = 'f32[16,512]{1,0:T(8,128)}', space=vmem, size = 0x8000, scoped, tag = 'scratch operand']
  #allocation3 [shape = 's32[2]{0}', space=sflag, size = 0x8, scoped, tag = 'scratch operand']
  #allocation4 [shape = 's32[1]{0}', space=sflag, size = 0x4, scoped, tag = 'scoped memory for tpu_custom_call.1']
  #allocation5 [shape = 'u8[512]{0}', space=smem, size = 0x200, scoped, tag = 'prefetched SMEM operand 0']
  #allocation16 [shape = 's32[]', space=sflag, size = 0x4, offset = 0, fixed_abs, tag = 'sflag constant byte address 0x0 - dummy sync flag']
  #allocation17 [shape = 's32[]', space=sflag, size = 0x4, offset = 0, fixed_abs, tag = 'sflag constant byte address 0x0 - dummy sync flag']
  %s0 = inlined_call_operand.hbm [shape: s32[8], index: 0, kind: input, shape index: {}]
  %s1 = inlined_call_operand.hbm [shape: f32[964,512], index: 1, kind: input, shape index: {}]
  %s2 = inlined_call_operand.hbm [shape: f32[1,512], index: 2, kind: input, shape index: {}]
  %s3 = inlined_call_operand.hbm [shape: bf16[512,512], index: 3, kind: input, shape index: {}]
  %s4 = inlined_call_operand.hbm [shape: f32[1,512], index: 4, kind: input, shape index: {}]
  %s5 = inlined_call_operand.hbm [shape: bf16[512,1024], index: 5, kind: input, shape index: {}]
  %s6 = inlined_call_operand.hbm [shape: f32[1,1024], index: 6, kind: input, shape index: {}]
  %s7 = inlined_call_operand.hbm [shape: f32[8,1024], index: 7, kind: output, shape index: {}]
  %s8 = sld [smem:[#allocation0]]
  $region79: #{tpu_custom_call.1} parent=0
    _
  %s10 = ssub.s32 1, %s8
  %s11 = scalar_select 0, %s10, %s8
  %13 = dma.hbm_to_smem %s0, 16, [#allocation5], [#allocation4]
  %14 = dma.done [#allocation4], 16
  %15 = sfence
  $region1: #{tpu_custom_call.1} parent=0
    #allocation6 [shape = 'u8[2048]{0}', space=vmem, size = 0x800, scoped, tag = 'input window, operand 2, single buffered']
    #allocation7 [shape = 's32[1]{0}', space=sflag, size = 0x4, scoped, tag = 'scoped memory for tpu_custom_call.1']
    #allocation8 [shape = 's32[1]{0}', space=sflag, size = 0x4, scoped, tag = 'scoped memory for tpu_custom_call.1']
    #allocation9 [shape = 'u8[524288]{0}', space=vmem, size = 0x80000, scoped, tag = 'input window, operand 3, single buffered']
    #allocation10 [shape = 's32[1]{0}', space=sflag, size = 0x4, scoped, tag = 'scoped memory for tpu_custom_call.1']
    #allocation11 [shape = 'u8[2048]{0}', space=vmem, size = 0x800, scoped, tag = 'input window, operand 4, single buffered']
    #allocation12 [shape = 'u8[1048576]{0}', space=vmem, size = 0x100000, scoped, tag = 'input window, operand 5, single buffered']
    #allocation13 [shape = 's32[1]{0}', space=sflag, size = 0x4, scoped, tag = 'scoped memory for tpu_custom_call.1']
    #allocation14 [shape = 'u8[4096]{0}', space=vmem, size = 0x1000, scoped, tag = 'input window, operand 6, single buffered']
    #allocation15 [shape = 'u8[32768]{0}', space=vmem, size = 0x8000, scoped, tag = 'output window, operand 0, single buffered']
    %16 = vsyncpa [#allocation7], 0
    %17 = vsyncpa [#allocation10], 0
    %18 = vsyncpa [#allocation13], 0
    %19 = vsyncpa [#allocation8], 0
    // Predicated region
    $region2: #{tpu_custom_call.1} parent=1 // pred_check
      _
    $region3: #{tpu_custom_call.1} parent=1 // pred_check_branch
      %21 = sbr.rel (0) target = $region5
    $region4: #{tpu_custom_call.1} parent=1 // pred_region
      %s23 = ssub.s32 64, 64
      %24 = vsyncadd [#allocation7], %s23
      %s26 = sshll.u32 [#allocation6], 4
      %s27 = int_to_ptr.vmem [resolvable:$true] %s26
      %29 = dma.hbm_to_vmem [thread:$0]  %s2, 64, %s27, [#allocation7]
    $region5: #{tpu_custom_call.1} parent=1 // pred_fallthru
      _
    // Predicated region
    $region6: #{tpu_custom_call.1} parent=1 // pred_check
      _
    $region7: #{tpu_custom_call.1} parent=1 // pred_check_branch
      %31 = sbr.rel (0) target = $region9
    $region8: #{tpu_custom_call.1} parent=1 // pred_region
      %s33 = ssub.s32 16384, 16384
      %34 = vsyncadd [#allocation10], %s33
      %s35 = sshll.u32 [#allocation9], 4
      %s36 = int_to_ptr.vmem [resolvable:$true] %s35
      %41 = dma.hbm_to_vmem [thread:$0]  %s3, 16384, %s36, [#allocation10], 256, 256, 16
    $region9: #{tpu_custom_call.1} parent=1 // pred_fallthru
      _
    // Predicated region
    $region10: #{tpu_custom_call.1} parent=1 // pred_check
      _
    $region11: #{tpu_custom_call.1} parent=1 // pred_check_branch
      %43 = sbr.rel (0) target = $region13
    $region12: #{tpu_custom_call.1} parent=1 // pred_region
      %s45 = ssub.s32 64, 64
      %46 = vsyncadd [#allocation10], %s45
      %s48 = sshll.u32 [#allocation11], 4
      %s49 = int_to_ptr.vmem [resolvable:$true] %s48
      %51 = dma.hbm_to_vmem [thread:$0]  %s4, 64, %s49, [#allocation10]
    $region13: #{tpu_custom_call.1} parent=1 // pred_fallthru
      _
    // Predicated region
    $region14: #{tpu_custom_call.1} parent=1 // pred_check
      _
    $region15: #{tpu_custom_call.1} parent=1 // pred_check_branch
      %53 = sbr.rel (0) target = $region17
    $region16: #{tpu_custom_call.1} parent=1 // pred_region
      %s55 = ssub.s32 32768, 32768
      %56 = vsyncadd [#allocation13], %s55
      %s57 = sshll.u32 [#allocation12], 4
      %s58 = int_to_ptr.vmem [resolvable:$true] %s57
      %63 = dma.hbm_to_vmem [thread:$0]  %s5, 32768, %s58, [#allocation13], 512, 512, 32
    $region17: #{tpu_custom_call.1} parent=1 // pred_fallthru
      _
    // Predicated region
    $region18: #{tpu_custom_call.1} parent=1 // pred_check
      _
    $region19: #{tpu_custom_call.1} parent=1 // pred_check_branch
      %65 = sbr.rel (0) target = $region21
    $region20: #{tpu_custom_call.1} parent=1 // pred_region
      %s67 = ssub.s32 128, 128
      %68 = vsyncadd [#allocation13], %s67
      %s70 = sshll.u32 [#allocation14], 4
      %s71 = int_to_ptr.vmem [resolvable:$true] %s70
      %73 = dma.hbm_to_vmem [thread:$0]  %s6, 128, %s71, [#allocation13]
    $region21: #{tpu_custom_call.1} parent=1 // pred_fallthru
      _
    // Predicated region
    $region22: #{tpu_custom_call.1} parent=1 // pred_check
      _
    $region23: #{tpu_custom_call.1} parent=1 // pred_check_branch
      %75 = sbr.rel (0) target = $region25
    $region24: #{tpu_custom_call.1} parent=1 // pred_region
      %76 = dma.done [#allocation7], 64
    $region25: #{tpu_custom_call.1} parent=1 // pred_fallthru
      _
    // Predicated region
    $region26: #{tpu_custom_call.1} parent=1 // pred_check
      _
    $region27: #{tpu_custom_call.1} parent=1 // pred_check_branch
      %78 = sbr.rel (0) target = $region29
    $region28: #{tpu_custom_call.1} parent=1 // pred_region
      %79 = dma.done [#allocation10], 16384
    $region29: #{tpu_custom_call.1} parent=1 // pred_fallthru
      _
    // Predicated region
    $region30: #{tpu_custom_call.1} parent=1 // pred_check
      _
    $region31: #{tpu_custom_call.1} parent=1 // pred_check_branch
      %81 = sbr.rel (0) target = $region33
    $region32: #{tpu_custom_call.1} parent=1 // pred_region
      %82 = dma.done [#allocation10], 64
    $region33: #{tpu_custom_call.1} parent=1 // pred_fallthru
      _
    // Predicated region
    $region34: #{tpu_custom_call.1} parent=1 // pred_check
      _
    $region35: #{tpu_custom_call.1} parent=1 // pred_check_branch
      %84 = sbr.rel (0) target = $region37
    $region36: #{tpu_custom_call.1} parent=1 // pred_region
      %85 = dma.done [#allocation13], 32768
    $region37: #{tpu_custom_call.1} parent=1 // pred_fallthru
      _
    // Predicated region
    $region38: #{tpu_custom_call.1} parent=1 // pred_check
      _
    $region39: #{tpu_custom_call.1} parent=1 // pred_check_branch
      %87 = sbr.rel (0) target = $region41
    $region40: #{tpu_custom_call.1} parent=1 // pred_region
      %88 = dma.done [#allocation13], 128
    $region41: #{tpu_custom_call.1} parent=1 // pred_fallthru
      _
    %s89 = sadd.s32 0, 0
    %s90 = sadd.s32 0, 0
    %s91 = ssub.s32 0, 0
    %s92 = ssub.s32 0, 0
    %p93 = scmp.ne.s32.totalorder 0, 0
    %p94 = scmp.lt.s32.totalorder 0, 0
    %p95 = pnand %p94, %p93
    %p96 = pneg %p95
    %s97 = sadd.s32 0, 2
    %s98 = scalar_select %p96, %s97, 0
    %s99 = ssub.s32 1, %s98
    %p100 = scmp.eq.s32.totalorder 0, 0
    // Predicated region
    $region42: #{tpu_custom_call.1} parent=1 // pred_check
      %p101 = pneg %p100
    $region43: #{tpu_custom_call.1} parent=1 // pred_check_branch
      %103 = sbr.rel (%p101) target = $region45
    $region44: #{tpu_custom_call.1} parent=1 // pred_region
      %s104 = smul.u32 %s90, 8
      loop: start=0, step=1, limit=8
      $region46: #{tpu_custom_call.1} parent=44 // loop_pre_header
        _
      $region47: #{tpu_custom_call.1} parent=44 // loop_header
        %s106 = sphi 0, %s110
        %p107 = scmp.ge.s32.totalorder %s106, 8
      $region48: #{tpu_custom_call.1} parent=44 // loop_header_branch
        %109 = sbr.rel (%p107) target = $region52
      $region49: #{tpu_custom_call.1} parent=44 // loop_body
        %s111 = sadd.s32 %s104, %s106
        %s112 = sld [smem:[#allocation5 + %s111]]
        %p113 = scmp.gt.s32.totalorder %s112, 0
        %s114 = scalar_select %p113, %s112, 0
        %p115 = scmp.lt.s32.totalorder %s114, 963
        %s116 = scalar_select %p115, %s114, 963
        %s117 = smul.u32 %s98, 8
        %s118 = sadd.s32 %s117, %s106
        %s119 = sshrl.u32 %s116, 3
        %s120 = sand.u32 %s116, 7
        %s121 = smul.u32 %s119, 32
        %s122 = sadd.s32 %s120, %s121
        %s123 = smul.addr %s122, 16
        %s124 = scalar_lea.hbm %s1, %s123
        %s125 = sshrl.u32 %s118, 3
        %s126 = sand.u32 %s118, 7
        %s127 = smul.u32 %s125, 32
        %s128 = sadd.s32 %s126, %s127
        %s129 = scalar_lea.vmem [#allocation2], %s128
        %s130 = scalar_lea.sflag [#allocation3], %s98
        %s132 = sshll.u32 %s129, 4
        %s133 = int_to_ptr.vmem [resolvable:$true] %s132
        %135 = dma.hbm_to_vmem [thread:$0]  %s124, 64, %s133, %s130, 128, 128, 1
      $region50: #{tpu_custom_call.1} parent=44 // loop_footer
        %s110 = sadd.s32 1, %s106
      $region51: #{tpu_custom_call.1} parent=44 // loop_footer_branch
        %105 = sbr.rel target = $region47
      $region52: #{tpu_custom_call.1} parent=44 // loop_exit
        _
    $region45: #{tpu_custom_call.1} parent=1 // pred_fallthru
      _
    %s136 = sadd.s32 0, 1
    %p137 = scmp.lt.s32.totalorder %s136, 1
    // Predicated region
    $region53: #{tpu_custom_call.1} parent=1 // pred_check
      %p138 = pneg %p137
    $region54: #{tpu_custom_call.1} parent=1 // pred_check_branch
      %140 = sbr.rel (%p138) target = $region56
    $region55: #{tpu_custom_call.1} parent=1 // pred_region
      %s141 = sadd.s32 %s90, 1
      %s142 = smul.u32 %s141, 8
      loop: start=0, step=1, limit=8
      $region57: #{tpu_custom_call.1} parent=55 // loop_pre_header
        _
      $region58: #{tpu_custom_call.1} parent=55 // loop_header
        %s144 = sphi 0, %s148
        %p145 = scmp.ge.s32.totalorder %s144, 8
      $region59: #{tpu_custom_call.1} parent=55 // loop_header_branch
        %147 = sbr.rel (%p145) target = $region63
      $region60: #{tpu_custom_call.1} parent=55 // loop_body
        %s149 = sadd.s32 %s142, %s144
        %s150 = sld [smem:[#allocation5 + %s149]]
        %p151 = scmp.gt.s32.totalorder %s150, 0
        %s152 = scalar_select %p151, %s150, 0
        %p153 = scmp.lt.s32.totalorder %s152, 963
        %s154 = scalar_select %p153, %s152, 963
        %s155 = smul.u32 %s99, 8
        %s156 = sadd.s32 %s155, %s144
        %s157 = sshrl.u32 %s154, 3
        %s158 = sand.u32 %s154, 7
        %s159 = smul.u32 %s157, 32
        %s160 = sadd.s32 %s158, %s159
        %s161 = smul.addr %s160, 16
        %s162 = scalar_lea.hbm %s1, %s161
        %s163 = sshrl.u32 %s156, 3
        %s164 = sand.u32 %s156, 7
        %s165 = smul.u32 %s163, 32
        %s166 = sadd.s32 %s164, %s165
        %s167 = scalar_lea.vmem [#allocation2], %s166
        %s168 = scalar_lea.sflag [#allocation3], %s99
        %s170 = sshll.u32 %s167, 4
        %s171 = int_to_ptr.vmem [resolvable:$true] %s170
        %173 = dma.hbm_to_vmem [thread:$0]  %s162, 64, %s171, %s168, 128, 128, 1
      $region61: #{tpu_custom_call.1} parent=55 // loop_footer
        %s148 = sadd.s32 1, %s144
      $region62: #{tpu_custom_call.1} parent=55 // loop_footer_branch
        %143 = sbr.rel target = $region58
      $region63: #{tpu_custom_call.1} parent=55 // loop_exit
        _
    $region56: #{tpu_custom_call.1} parent=1 // pred_fallthru
      _
    loop: start=0, step=1, limit=8
    $region64: #{tpu_custom_call.1} parent=1 // loop_pre_header
      _
    $region65: #{tpu_custom_call.1} parent=1 // loop_header
      %s175 = sphi 0, %s179
      %p176 = scmp.ge.s32.totalorder %s175, 8
    $region66: #{tpu_custom_call.1} parent=1 // loop_header_branch
      %178 = sbr.rel (%p176) target = $region70
    $region67: #{tpu_custom_call.1} parent=1 // loop_body
      %s180 = scalar_lea.sflag [#allocation3], %s98
      %s181 = smul.u32 1, 4
      %s182 = sshll.u32 %s181, 4
      %183 = dma.done %s180, %s182
    $region68: #{tpu_custom_call.1} parent=1 // loop_footer
      %s179 = sadd.s32 1, %s175
    $region69: #{tpu_custom_call.1} parent=1 // loop_footer_branch
      %174 = sbr.rel target = $region65
    $region70: #{tpu_custom_call.1} parent=1 // loop_exit
      _
    %s184 = smul.u32 %s98, 8
    %s185 = sshra.s32 %s184, 3
    %s186 = sand.u32 %s184, 7
    %s187 = smul.u32 %s185, 4
    %s188 = smul.addr %s187, 8
    %s189 = scalar_lea.vmem [#allocation2], %s188
    %v190 = vld [vmem:[%s189] sm:$0xff]
    %v191 = vld [vmem:[%s189 + $0x8] sm:$0xff]
    %v192 = vld [vmem:[%s189 + $0x10] sm:$0xff]
    %v193 = vld [vmem:[%s189 + $0x18] sm:$0xff]
    %v194 = vld [vmem:[#allocation6] sm:$0xf]
    %v196 = vlaneseq
    %v197 = vshrl.u32 %v196, 7
    %v198 = vsub.s32 0, %v197
    %v199 = vrot.slane %v194, %v198
    %v200 = vlaneseq
    %v201 = vshrl.u32 %v200, 7
    %v202 = vsub.s32 1, %v201
    %v203 = vrot.slane %v194, %v202
    %v204 = vlaneseq
    %v205 = vshrl.u32 %v204, 7
    %v206 = vsub.s32 2, %v205
    %v207 = vrot.slane %v194, %v206
    %v208 = vlaneseq
    %v209 = vshrl.u32 %v208, 7
    %v210 = vsub.s32 3, %v209
    %v211 = vrot.slane %v194, %v210
    %v216 = vadd.f32 %v190, %v199
    %v217 = vadd.f32 %v191, %v203
    %v218 = vadd.f32 %v192, %v207
    %v219 = vadd.f32 %v193, %v211
    %v220 = vmax.f32 %v216, 0.0
    %v221 = vmax.f32 %v217, 0.0
    %v222 = vmax.f32 %v218, 0.0
    %v223 = vmax.f32 %v219, 0.0
    %v224 = vpack.c.bf16 %v220, %v220
    %v225 = vpack.c.bf16 %v221, %v221
    %v226 = vpack.c.bf16 %v222, %v222
    %v227 = vpack.c.bf16 %v223, %v223
    %v228 = vld [vmem:[#allocation9] sm:$0xff]
    %v229 = vld [vmem:[#allocation9 + $0x8] sm:$0xff]
    %v230 = vld [vmem:[#allocation9 + $0x10] sm:$0xff]
    %v231 = vld [vmem:[#allocation9 + $0x18] sm:$0xff]
    %v232 = vld [vmem:[#allocation9 + $0x20] sm:$0xff]
    %v233 = vld [vmem:[#allocation9 + $0x28] sm:$0xff]
    %v234 = vld [vmem:[#allocation9 + $0x30] sm:$0xff]
    %v235 = vld [vmem:[#allocation9 + $0x38] sm:$0xff]
    %v236 = vld [vmem:[#allocation9 + $0x40] sm:$0xff]
    %v237 = vld [vmem:[#allocation9 + $0x48] sm:$0xff]
    %v238 = vld [vmem:[#allocation9 + $0x50] sm:$0xff]
    %v239 = vld [vmem:[#allocation9 + $0x58] sm:$0xff]
    %v240 = vld [vmem:[#allocation9 + $0x60] sm:$0xff]
    %v241 = vld [vmem:[#allocation9 + $0x68] sm:$0xff]
    %v242 = vld [vmem:[#allocation9 + $0x70] sm:$0xff]
    %v243 = vld [vmem:[#allocation9 + $0x78] sm:$0xff]
    %v244 = vld [vmem:[#allocation9 + $0x80] sm:$0xff]
    %v245 = vld [vmem:[#allocation9 + $0x88] sm:$0xff]
    %v246 = vld [vmem:[#allocation9 + $0x90] sm:$0xff]
    %v247 = vld [vmem:[#allocation9 + $0x98] sm:$0xff]
    %v248 = vld [vmem:[#allocation9 + $0xa0] sm:$0xff]
    %v249 = vld [vmem:[#allocation9 + $0xa8] sm:$0xff]
    %v250 = vld [vmem:[#allocation9 + $0xb0] sm:$0xff]
    %v251 = vld [vmem:[#allocation9 + $0xb8] sm:$0xff]
    %v252 = vld [vmem:[#allocation9 + $0xc0] sm:$0xff]
    %v253 = vld [vmem:[#allocation9 + $0xc8] sm:$0xff]
    %v254 = vld [vmem:[#allocation9 + $0xd0] sm:$0xff]
    %v255 = vld [vmem:[#allocation9 + $0xd8] sm:$0xff]
    %v256 = vld [vmem:[#allocation9 + $0xe0] sm:$0xff]
    %v257 = vld [vmem:[#allocation9 + $0xe8] sm:$0xff]
    %v258 = vld [vmem:[#allocation9 + $0xf0] sm:$0xff]
    %v259 = vld [vmem:[#allocation9 + $0xf8] sm:$0xff]
    %v260 = vld [vmem:[#allocation9 + $0x100] sm:$0xff]
    %v261 = vld [vmem:[#allocation9 + $0x108] sm:$0xff]
    %v262 = vld [vmem:[#allocation9 + $0x110] sm:$0xff]
    %v263 = vld [vmem:[#allocation9 + $0x118] sm:$0xff]
    %v264 = vld [vmem:[#allocation9 + $0x120] sm:$0xff]
    %v265 = vld [vmem:[#allocation9 + $0x128] sm:$0xff]
    %v266 = vld [vmem:[#allocation9 + $0x130] sm:$0xff]
    %v267 = vld [vmem:[#allocation9 + $0x138] sm:$0xff]
    %v268 = vld [vmem:[#allocation9 + $0x140] sm:$0xff]
    %v269 = vld [vmem:[#allocation9 + $0x148] sm:$0xff]
    %v270 = vld [vmem:[#allocation9 + $0x150] sm:$0xff]
    %v271 = vld [vmem:[#allocation9 + $0x158] sm:$0xff]
    %v272 = vld [vmem:[#allocation9 + $0x160] sm:$0xff]
    %v273 = vld [vmem:[#allocation9 + $0x168] sm:$0xff]
    %v274 = vld [vmem:[#allocation9 + $0x170] sm:$0xff]
    %v275 = vld [vmem:[#allocation9 + $0x178] sm:$0xff]
    %v276 = vld [vmem:[#allocation9 + $0x180] sm:$0xff]
    %v277 = vld [vmem:[#allocation9 + $0x188] sm:$0xff]
    %v278 = vld [vmem:[#allocation9 + $0x190] sm:$0xff]
    %v279 = vld [vmem:[#allocation9 + $0x198] sm:$0xff]
    %v280 = vld [vmem:[#allocation9 + $0x1a0] sm:$0xff]
    %v281 = vld [vmem:[#allocation9 + $0x1a8] sm:$0xff]
    %v282 = vld [vmem:[#allocation9 + $0x1b0] sm:$0xff]
    %v283 = vld [vmem:[#allocation9 + $0x1b8] sm:$0xff]
    %v284 = vld [vmem:[#allocation9 + $0x1c0] sm:$0xff]
    %v285 = vld [vmem:[#allocation9 + $0x1c8] sm:$0xff]
    %v286 = vld [vmem:[#allocation9 + $0x1d0] sm:$0xff]
    %v287 = vld [vmem:[#allocation9 + $0x1d8] sm:$0xff]
    %v288 = vld [vmem:[#allocation9 + $0x1e0] sm:$0xff]
    %v289 = vld [vmem:[#allocation9 + $0x1e8] sm:$0xff]
    %v290 = vld [vmem:[#allocation9 + $0x1f0] sm:$0xff]
    %v291 = vld [vmem:[#allocation9 + $0x1f8] sm:$0xff]
    %v292 = vld [vmem:[#allocation9 + $0x200] sm:$0xff]
    %v293 = vld [vmem:[#allocation9 + $0x208] sm:$0xff]
    %v294 = vld [vmem:[#allocation9 + $0x210] sm:$0xff]
    %v295 = vld [vmem:[#allocation9 + $0x218] sm:$0xff]
    %v296 = vld [vmem:[#allocation9 + $0x220] sm:$0xff]
    %v297 = vld [vmem:[#allocation9 + $0x228] sm:$0xff]
    %v298 = vld [vmem:[#allocation9 + $0x230] sm:$0xff]
    %v299 = vld [vmem:[#allocation9 + $0x238] sm:$0xff]
    %v300 = vld [vmem:[#allocation9 + $0x240] sm:$0xff]
    %v301 = vld [vmem:[#allocation9 + $0x248] sm:$0xff]
    %v302 = vld [vmem:[#allocation9 + $0x250] sm:$0xff]
    %v303 = vld [vmem:[#allocation9 + $0x258] sm:$0xff]
    %v304 = vld [vmem:[#allocation9 + $0x260] sm:$0xff]
    %v305 = vld [vmem:[#allocation9 + $0x268] sm:$0xff]
    %v306 = vld [vmem:[#allocation9 + $0x270] sm:$0xff]
    %v307 = vld [vmem:[#allocation9 + $0x278] sm:$0xff]
    %v308 = vld [vmem:[#allocation9 + $0x280] sm:$0xff]
    %v309 = vld [vmem:[#allocation9 + $0x288] sm:$0xff]
    %v310 = vld [vmem:[#allocation9 + $0x290] sm:$0xff]
    %v311 = vld [vmem:[#allocation9 + $0x298] sm:$0xff]
    %v312 = vld [vmem:[#allocation9 + $0x2a0] sm:$0xff]
    %v313 = vld [vmem:[#allocation9 + $0x2a8] sm:$0xff]
    %v314 = vld [vmem:[#allocation9 + $0x2b0] sm:$0xff]
    %v315 = vld [vmem:[#allocation9 + $0x2b8] sm:$0xff]
    %v316 = vld [vmem:[#allocation9 + $0x2c0] sm:$0xff]
    %v317 = vld [vmem:[#allocation9 + $0x2c8] sm:$0xff]
    %v318 = vld [vmem:[#allocation9 + $0x2d0] sm:$0xff]
    %v319 = vld [vmem:[#allocation9 + $0x2d8] sm:$0xff]
    %v320 = vld [vmem:[#allocation9 + $0x2e0] sm:$0xff]
    %v321 = vld [vmem:[#allocation9 + $0x2e8] sm:$0xff]
    %v322 = vld [vmem:[#allocation9 + $0x2f0] sm:$0xff]
    %v323 = vld [vmem:[#allocation9 + $0x2f8] sm:$0xff]
    %v324 = vld [vmem:[#allocation9 + $0x300] sm:$0xff]
    %v325 = vld [vmem:[#allocation9 + $0x308] sm:$0xff]
    %v326 = vld [vmem:[#allocation9 + $0x310] sm:$0xff]
    %v327 = vld [vmem:[#allocation9 + $0x318] sm:$0xff]
    %v328 = vld [vmem:[#allocation9 + $0x320] sm:$0xff]
    %v329 = vld [vmem:[#allocation9 + $0x328] sm:$0xff]
    %v330 = vld [vmem:[#allocation9 + $0x330] sm:$0xff]
    %v331 = vld [vmem:[#allocation9 + $0x338] sm:$0xff]
    %v332 = vld [vmem:[#allocation9 + $0x340] sm:$0xff]
    %v333 = vld [vmem:[#allocation9 + $0x348] sm:$0xff]
    %v334 = vld [vmem:[#allocation9 + $0x350] sm:$0xff]
    %v335 = vld [vmem:[#allocation9 + $0x358] sm:$0xff]
    %v336 = vld [vmem:[#allocation9 + $0x360] sm:$0xff]
    %v337 = vld [vmem:[#allocation9 + $0x368] sm:$0xff]
    %v338 = vld [vmem:[#allocation9 + $0x370] sm:$0xff]
    %v339 = vld [vmem:[#allocation9 + $0x378] sm:$0xff]
    %v340 = vld [vmem:[#allocation9 + $0x380] sm:$0xff]
    %v341 = vld [vmem:[#allocation9 + $0x388] sm:$0xff]
    %v342 = vld [vmem:[#allocation9 + $0x390] sm:$0xff]
    %v343 = vld [vmem:[#allocation9 + $0x398] sm:$0xff]
    %v344 = vld [vmem:[#allocation9 + $0x3a0] sm:$0xff]
    %v345 = vld [vmem:[#allocation9 + $0x3a8] sm:$0xff]
    %v346 = vld [vmem:[#allocation9 + $0x3b0] sm:$0xff]
    %v347 = vld [vmem:[#allocation9 + $0x3b8] sm:$0xff]
    %v348 = vld [vmem:[#allocation9 + $0x3c0] sm:$0xff]
    %v349 = vld [vmem:[#allocation9 + $0x3c8] sm:$0xff]
    %v350 = vld [vmem:[#allocation9 + $0x3d0] sm:$0xff]
    %v351 = vld [vmem:[#allocation9 + $0x3d8] sm:$0xff]
    %v352 = vld [vmem:[#allocation9 + $0x3e0] sm:$0xff]
    %v353 = vld [vmem:[#allocation9 + $0x3e8] sm:$0xff]
    %v354 = vld [vmem:[#allocation9 + $0x3f0] sm:$0xff]
    %v355 = vld [vmem:[#allocation9 + $0x3f8] sm:$0xff]
    %v356 = vld [vmem:[#allocation11] sm:$0xf]
    %v358 = vlaneseq
    %v359 = vshrl.u32 %v358, 7
    %v360 = vsub.s32 0, %v359
    %v361 = vrot.slane %v356, %v360
    %v362 = vlaneseq
    %v363 = vshrl.u32 %v362, 7
    %v364 = vsub.s32 1, %v363
    %v365 = vrot.slane %v356, %v364
    %v366 = vlaneseq
    %v367 = vshrl.u32 %v366, 7
    %v368 = vsub.s32 2, %v367
    %v369 = vrot.slane %v356, %v368
    %v370 = vlaneseq
    %v371 = vshrl.u32 %v370, 7
    %v372 = vsub.s32 3, %v371
    %v373 = vrot.slane %v356, %v372
    %v506 = vunpack.c.l.b16 %v228
    %v507 = vunpack.c.h.b16 %v228
    %v508 = vunpack.c.l.b16 %v229
    %v509 = vunpack.c.h.b16 %v229
    %v510 = vunpack.c.l.b16 %v230
    %v511 = vunpack.c.h.b16 %v230
    %v512 = vunpack.c.l.b16 %v231
    %v513 = vunpack.c.h.b16 %v231
    %v514 = vunpack.c.l.b16 %v232
    %v515 = vunpack.c.h.b16 %v232
    %v516 = vunpack.c.l.b16 %v233
    %v517 = vunpack.c.h.b16 %v233
    %v518 = vunpack.c.l.b16 %v234
    %v519 = vunpack.c.h.b16 %v234
    %v520 = vunpack.c.l.b16 %v235
    %v521 = vunpack.c.h.b16 %v235
    %v522 = vunpack.c.l.b16 %v236
    %v523 = vunpack.c.h.b16 %v236
    %v524 = vunpack.c.l.b16 %v237
    %v525 = vunpack.c.h.b16 %v237
    %v526 = vunpack.c.l.b16 %v238
    %v527 = vunpack.c.h.b16 %v238
    %v528 = vunpack.c.l.b16 %v239
    %v529 = vunpack.c.h.b16 %v239
    %v530 = vunpack.c.l.b16 %v240
    %v531 = vunpack.c.h.b16 %v240
    %v532 = vunpack.c.l.b16 %v241
    %v533 = vunpack.c.h.b16 %v241
    %v534 = vunpack.c.l.b16 %v242
    %v535 = vunpack.c.h.b16 %v242
    %v536 = vunpack.c.l.b16 %v243
    %v537 = vunpack.c.h.b16 %v243
    %v538 = vunpack.c.l.b16 %v244
    %v539 = vunpack.c.h.b16 %v244
    %v540 = vunpack.c.l.b16 %v245
    %v541 = vunpack.c.h.b16 %v245
    %v542 = vunpack.c.l.b16 %v246
    %v543 = vunpack.c.h.b16 %v246
    %v544 = vunpack.c.l.b16 %v247
    %v545 = vunpack.c.h.b16 %v247
    %v546 = vunpack.c.l.b16 %v248
    %v547 = vunpack.c.h.b16 %v248
    %v548 = vunpack.c.l.b16 %v249
    %v549 = vunpack.c.h.b16 %v249
    %v550 = vunpack.c.l.b16 %v250
    %v551 = vunpack.c.h.b16 %v250
    %v552 = vunpack.c.l.b16 %v251
    %v553 = vunpack.c.h.b16 %v251
    %v554 = vunpack.c.l.b16 %v252
    %v555 = vunpack.c.h.b16 %v252
    %v556 = vunpack.c.l.b16 %v253
    %v557 = vunpack.c.h.b16 %v253
    %v558 = vunpack.c.l.b16 %v254
    %v559 = vunpack.c.h.b16 %v254
    %v560 = vunpack.c.l.b16 %v255
    %v561 = vunpack.c.h.b16 %v255
    %v562 = vunpack.c.l.b16 %v256
    %v563 = vunpack.c.h.b16 %v256
    %v564 = vunpack.c.l.b16 %v257
    %v565 = vunpack.c.h.b16 %v257
    %v566 = vunpack.c.l.b16 %v258
    %v567 = vunpack.c.h.b16 %v258
    %v568 = vunpack.c.l.b16 %v259
    %v569 = vunpack.c.h.b16 %v259
    %v570 = vunpack.c.l.b16 %v260
    %v571 = vunpack.c.h.b16 %v260
    %v572 = vunpack.c.l.b16 %v261
    %v573 = vunpack.c.h.b16 %v261
    %v574 = vunpack.c.l.b16 %v262
    %v575 = vunpack.c.h.b16 %v262
    %v576 = vunpack.c.l.b16 %v263
    %v577 = vunpack.c.h.b16 %v263
    %v578 = vunpack.c.l.b16 %v264
    %v579 = vunpack.c.h.b16 %v264
    %v580 = vunpack.c.l.b16 %v265
    %v581 = vunpack.c.h.b16 %v265
    %v582 = vunpack.c.l.b16 %v266
    %v583 = vunpack.c.h.b16 %v266
    %v584 = vunpack.c.l.b16 %v267
    %v585 = vunpack.c.h.b16 %v267
    %v586 = vunpack.c.l.b16 %v268
    %v587 = vunpack.c.h.b16 %v268
    %v588 = vunpack.c.l.b16 %v269
    %v589 = vunpack.c.h.b16 %v269
    %v590 = vunpack.c.l.b16 %v270
    %v591 = vunpack.c.h.b16 %v270
    %v592 = vunpack.c.l.b16 %v271
    %v593 = vunpack.c.h.b16 %v271
    %v594 = vunpack.c.l.b16 %v272
    %v595 = vunpack.c.h.b16 %v272
    %v596 = vunpack.c.l.b16 %v273
    %v597 = vunpack.c.h.b16 %v273
    %v598 = vunpack.c.l.b16 %v274
    %v599 = vunpack.c.h.b16 %v274
    %v600 = vunpack.c.l.b16 %v275
    %v601 = vunpack.c.h.b16 %v275
    %v602 = vunpack.c.l.b16 %v276
    %v603 = vunpack.c.h.b16 %v276
    %v604 = vunpack.c.l.b16 %v277
    %v605 = vunpack.c.h.b16 %v277
    %v606 = vunpack.c.l.b16 %v278
    %v607 = vunpack.c.h.b16 %v278
    %v608 = vunpack.c.l.b16 %v279
    %v609 = vunpack.c.h.b16 %v279
    %v610 = vunpack.c.l.b16 %v280
    %v611 = vunpack.c.h.b16 %v280
    %v612 = vunpack.c.l.b16 %v281
    %v613 = vunpack.c.h.b16 %v281
    %v614 = vunpack.c.l.b16 %v282
    %v615 = vunpack.c.h.b16 %v282
    %v616 = vunpack.c.l.b16 %v283
    %v617 = vunpack.c.h.b16 %v283
    %v618 = vunpack.c.l.b16 %v284
    %v619 = vunpack.c.h.b16 %v284
    %v620 = vunpack.c.l.b16 %v285
    %v621 = vunpack.c.h.b16 %v285
    %v622 = vunpack.c.l.b16 %v286
    %v623 = vunpack.c.h.b16 %v286
    %v624 = vunpack.c.l.b16 %v287
    %v625 = vunpack.c.h.b16 %v287
    %v626 = vunpack.c.l.b16 %v288
    %v627 = vunpack.c.h.b16 %v288
    %v628 = vunpack.c.l.b16 %v289
    %v629 = vunpack.c.h.b16 %v289
    %v630 = vunpack.c.l.b16 %v290
    %v631 = vunpack.c.h.b16 %v290
    %v632 = vunpack.c.l.b16 %v291
    %v633 = vunpack.c.h.b16 %v291
    %v634 = vunpack.c.l.b16 %v292
    %v635 = vunpack.c.h.b16 %v292
    %v636 = vunpack.c.l.b16 %v293
    %v637 = vunpack.c.h.b16 %v293
    %v638 = vunpack.c.l.b16 %v294
    %v639 = vunpack.c.h.b16 %v294
    %v640 = vunpack.c.l.b16 %v295
    %v641 = vunpack.c.h.b16 %v295
    %v642 = vunpack.c.l.b16 %v296
    %v643 = vunpack.c.h.b16 %v296
    %v644 = vunpack.c.l.b16 %v297
    %v645 = vunpack.c.h.b16 %v297
    %v646 = vunpack.c.l.b16 %v298
    %v647 = vunpack.c.h.b16 %v298
    %v648 = vunpack.c.l.b16 %v299
    %v649 = vunpack.c.h.b16 %v299
    %v650 = vunpack.c.l.b16 %v300
    %v651 = vunpack.c.h.b16 %v300
    %v652 = vunpack.c.l.b16 %v301
    %v653 = vunpack.c.h.b16 %v301
    %v654 = vunpack.c.l.b16 %v302
    %v655 = vunpack.c.h.b16 %v302
    %v656 = vunpack.c.l.b16 %v303
    %v657 = vunpack.c.h.b16 %v303
    %v658 = vunpack.c.l.b16 %v304
    %v659 = vunpack.c.h.b16 %v304
    %v660 = vunpack.c.l.b16 %v305
    %v661 = vunpack.c.h.b16 %v305
    %v662 = vunpack.c.l.b16 %v306
    %v663 = vunpack.c.h.b16 %v306
    %v664 = vunpack.c.l.b16 %v307
    %v665 = vunpack.c.h.b16 %v307
    %v666 = vunpack.c.l.b16 %v308
    %v667 = vunpack.c.h.b16 %v308
    %v668 = vunpack.c.l.b16 %v309
    %v669 = vunpack.c.h.b16 %v309
    %v670 = vunpack.c.l.b16 %v310
    %v671 = vunpack.c.h.b16 %v310
    %v672 = vunpack.c.l.b16 %v311
    %v673 = vunpack.c.h.b16 %v311
    %v674 = vunpack.c.l.b16 %v312
    %v675 = vunpack.c.h.b16 %v312
    %v676 = vunpack.c.l.b16 %v313
    %v677 = vunpack.c.h.b16 %v313
    %v678 = vunpack.c.l.b16 %v314
    %v679 = vunpack.c.h.b16 %v314
    %v680 = vunpack.c.l.b16 %v315
    %v681 = vunpack.c.h.b16 %v315
    %v682 = vunpack.c.l.b16 %v316
    %v683 = vunpack.c.h.b16 %v316
    %v684 = vunpack.c.l.b16 %v317
    %v685 = vunpack.c.h.b16 %v317
    %v686 = vunpack.c.l.b16 %v318
    %v687 = vunpack.c.h.b16 %v318
    %v688 = vunpack.c.l.b16 %v319
    %v689 = vunpack.c.h.b16 %v319
    %v690 = vunpack.c.l.b16 %v320
    %v691 = vunpack.c.h.b16 %v320
    %v692 = vunpack.c.l.b16 %v321
    %v693 = vunpack.c.h.b16 %v321
    %v694 = vunpack.c.l.b16 %v322
    %v695 = vunpack.c.h.b16 %v322
    %v696 = vunpack.c.l.b16 %v323
    %v697 = vunpack.c.h.b16 %v323
    %v698 = vunpack.c.l.b16 %v324
    %v699 = vunpack.c.h.b16 %v324
    %v700 = vunpack.c.l.b16 %v325
    %v701 = vunpack.c.h.b16 %v325
    %v702 = vunpack.c.l.b16 %v326
    %v703 = vunpack.c.h.b16 %v326
    %v704 = vunpack.c.l.b16 %v327
    %v705 = vunpack.c.h.b16 %v327
    %v706 = vunpack.c.l.b16 %v328
    %v707 = vunpack.c.h.b16 %v328
    %v708 = vunpack.c.l.b16 %v329
    %v709 = vunpack.c.h.b16 %v329
    %v710 = vunpack.c.l.b16 %v330
    %v711 = vunpack.c.h.b16 %v330
    %v712 = vunpack.c.l.b16 %v331
    %v713 = vunpack.c.h.b16 %v331
    %v714 = vunpack.c.l.b16 %v332
    %v715 = vunpack.c.h.b16 %v332
    %v716 = vunpack.c.l.b16 %v333
    %v717 = vunpack.c.h.b16 %v333
    %v718 = vunpack.c.l.b16 %v334
    %v719 = vunpack.c.h.b16 %v334
    %v720 = vunpack.c.l.b16 %v335
    %v721 = vunpack.c.h.b16 %v335
    %v722 = vunpack.c.l.b16 %v336
    %v723 = vunpack.c.h.b16 %v336
    %v724 = vunpack.c.l.b16 %v337
    %v725 = vunpack.c.h.b16 %v337
    %v726 = vunpack.c.l.b16 %v338
    %v727 = vunpack.c.h.b16 %v338
    %v728 = vunpack.c.l.b16 %v339
    %v729 = vunpack.c.h.b16 %v339
    %v730 = vunpack.c.l.b16 %v340
    %v731 = vunpack.c.h.b16 %v340
    %v732 = vunpack.c.l.b16 %v341
    %v733 = vunpack.c.h.b16 %v341
    %v734 = vunpack.c.l.b16 %v342
    %v735 = vunpack.c.h.b16 %v342
    %v736 = vunpack.c.l.b16 %v343
    %v737 = vunpack.c.h.b16 %v343
    %v738 = vunpack.c.l.b16 %v344
    %v739 = vunpack.c.h.b16 %v344
    %v740 = vunpack.c.l.b16 %v345
    %v741 = vunpack.c.h.b16 %v345
    %v742 = vunpack.c.l.b16 %v346
    %v743 = vunpack.c.h.b16 %v346
    %v744 = vunpack.c.l.b16 %v347
    %v745 = vunpack.c.h.b16 %v347
    %v746 = vunpack.c.l.b16 %v348
    %v747 = vunpack.c.h.b16 %v348
    %v748 = vunpack.c.l.b16 %v349
    %v749 = vunpack.c.h.b16 %v349
    %v750 = vunpack.c.l.b16 %v350
    %v751 = vunpack.c.h.b16 %v350
    %v752 = vunpack.c.l.b16 %v351
    %v753 = vunpack.c.h.b16 %v351
    %v754 = vunpack.c.l.b16 %v352
    %v755 = vunpack.c.h.b16 %v352
    %v756 = vunpack.c.l.b16 %v353
    %v757 = vunpack.c.h.b16 %v353
    %v758 = vunpack.c.l.b16 %v354
    %v759 = vunpack.c.h.b16 %v354
    %v760 = vunpack.c.l.b16 %v355
    %v761 = vunpack.c.h.b16 %v355
    %v762 = vpack.c.b16 %v510, %v506
    %v763 = vpack.c.b16 %v511, %v507
    %v764 = vpack.c.b16 %v512, %v508
    %v765 = vpack.c.b16 %v513, %v509
    %v766 = vpack.c.b16 %v518, %v514
    %v767 = vpack.c.b16 %v519, %v515
    %v768 = vpack.c.b16 %v520, %v516
    %v769 = vpack.c.b16 %v521, %v517
    %v770 = vpack.c.b16 %v526, %v522
    %v771 = vpack.c.b16 %v527, %v523
    %v772 = vpack.c.b16 %v528, %v524
    %v773 = vpack.c.b16 %v529, %v525
    %v774 = vpack.c.b16 %v534, %v530
    %v775 = vpack.c.b16 %v535, %v531
    %v776 = vpack.c.b16 %v536, %v532
    %v777 = vpack.c.b16 %v537, %v533
    %v778 = vpack.c.b16 %v542, %v538
    %v779 = vpack.c.b16 %v543, %v539
    %v780 = vpack.c.b16 %v544, %v540
    %v781 = vpack.c.b16 %v545, %v541
    %v782 = vpack.c.b16 %v550, %v546
    %v783 = vpack.c.b16 %v551, %v547
    %v784 = vpack.c.b16 %v552, %v548
    %v785 = vpack.c.b16 %v553, %v549
    %v786 = vpack.c.b16 %v558, %v554
    %v787 = vpack.c.b16 %v559, %v555
    %v788 = vpack.c.b16 %v560, %v556
    %v789 = vpack.c.b16 %v561, %v557
    %v790 = vpack.c.b16 %v566, %v562
    %v791 = vpack.c.b16 %v567, %v563
    %v792 = vpack.c.b16 %v568, %v564
    %v793 = vpack.c.b16 %v569, %v565
    %v794 = vpack.c.b16 %v574, %v570
    %v795 = vpack.c.b16 %v575, %v571
    %v796 = vpack.c.b16 %v576, %v572
    %v797 = vpack.c.b16 %v577, %v573
    %v798 = vpack.c.b16 %v582, %v578
    %v799 = vpack.c.b16 %v583, %v579
    %v800 = vpack.c.b16 %v584, %v580
    %v801 = vpack.c.b16 %v585, %v581
    %v802 = vpack.c.b16 %v590, %v586
    %v803 = vpack.c.b16 %v591, %v587
    %v804 = vpack.c.b16 %v592, %v588
    %v805 = vpack.c.b16 %v593, %v589
    %v806 = vpack.c.b16 %v598, %v594
    %v807 = vpack.c.b16 %v599, %v595
    %v808 = vpack.c.b16 %v600, %v596
    %v809 = vpack.c.b16 %v601, %v597
    %v810 = vpack.c.b16 %v606, %v602
    %v811 = vpack.c.b16 %v607, %v603
    %v812 = vpack.c.b16 %v608, %v604
    %v813 = vpack.c.b16 %v609, %v605
    %v814 = vpack.c.b16 %v614, %v610
    %v815 = vpack.c.b16 %v615, %v611
    %v816 = vpack.c.b16 %v616, %v612
    %v817 = vpack.c.b16 %v617, %v613
    %v818 = vpack.c.b16 %v622, %v618
    %v819 = vpack.c.b16 %v623, %v619
    %v820 = vpack.c.b16 %v624, %v620
    %v821 = vpack.c.b16 %v625, %v621
    %v822 = vpack.c.b16 %v630, %v626
    %v823 = vpack.c.b16 %v631, %v627
    %v824 = vpack.c.b16 %v632, %v628
    %v825 = vpack.c.b16 %v633, %v629
    %v826 = vpack.c.b16 %v638, %v634
    %v827 = vpack.c.b16 %v639, %v635
    %v828 = vpack.c.b16 %v640, %v636
    %v829 = vpack.c.b16 %v641, %v637
    %v830 = vpack.c.b16 %v646, %v642
    %v831 = vpack.c.b16 %v647, %v643
    %v832 = vpack.c.b16 %v648, %v644
    %v833 = vpack.c.b16 %v649, %v645
    %v834 = vpack.c.b16 %v654, %v650
    %v835 = vpack.c.b16 %v655, %v651
    %v836 = vpack.c.b16 %v656, %v652
    %v837 = vpack.c.b16 %v657, %v653
    %v838 = vpack.c.b16 %v662, %v658
    %v839 = vpack.c.b16 %v663, %v659
    %v840 = vpack.c.b16 %v664, %v660
    %v841 = vpack.c.b16 %v665, %v661
    %v842 = vpack.c.b16 %v670, %v666
    %v843 = vpack.c.b16 %v671, %v667
    %v844 = vpack.c.b16 %v672, %v668
    %v845 = vpack.c.b16 %v673, %v669
    %v846 = vpack.c.b16 %v678, %v674
    %v847 = vpack.c.b16 %v679, %v675
    %v848 = vpack.c.b16 %v680, %v676
    %v849 = vpack.c.b16 %v681, %v677
    %v850 = vpack.c.b16 %v686, %v682
    %v851 = vpack.c.b16 %v687, %v683
    %v852 = vpack.c.b16 %v688, %v684
    %v853 = vpack.c.b16 %v689, %v685
    %v854 = vpack.c.b16 %v694, %v690
    %v855 = vpack.c.b16 %v695, %v691
    %v856 = vpack.c.b16 %v696, %v692
    %v857 = vpack.c.b16 %v697, %v693
    %v858 = vpack.c.b16 %v702, %v698
    %v859 = vpack.c.b16 %v703, %v699
    %v860 = vpack.c.b16 %v704, %v700
    %v861 = vpack.c.b16 %v705, %v701
    %v862 = vpack.c.b16 %v710, %v706
    %v863 = vpack.c.b16 %v711, %v707
    %v864 = vpack.c.b16 %v712, %v708
    %v865 = vpack.c.b16 %v713, %v709
    %v866 = vpack.c.b16 %v718, %v714
    %v867 = vpack.c.b16 %v719, %v715
    %v868 = vpack.c.b16 %v720, %v716
    %v869 = vpack.c.b16 %v721, %v717
    %v870 = vpack.c.b16 %v726, %v722
    %v871 = vpack.c.b16 %v727, %v723
    %v872 = vpack.c.b16 %v728, %v724
    %v873 = vpack.c.b16 %v729, %v725
    %v874 = vpack.c.b16 %v734, %v730
    %v875 = vpack.c.b16 %v735, %v731
    %v876 = vpack.c.b16 %v736, %v732
    %v877 = vpack.c.b16 %v737, %v733
    %v878 = vpack.c.b16 %v742, %v738
    %v879 = vpack.c.b16 %v743, %v739
    %v880 = vpack.c.b16 %v744, %v740
    %v881 = vpack.c.b16 %v745, %v741
    %v882 = vpack.c.b16 %v750, %v746
    %v883 = vpack.c.b16 %v751, %v747
    %v884 = vpack.c.b16 %v752, %v748
    %v885 = vpack.c.b16 %v753, %v749
    %v886 = vpack.c.b16 %v758, %v754
    %v887 = vpack.c.b16 %v759, %v755
    %v888 = vpack.c.b16 %v760, %v756
    %v889 = vpack.c.b16 %v761, %v757
    %1018 = vmatprep.subr.bf16.mxu0 %v763
    %1019 = vmatpush1.bf16.msra.mxu0 %v762
    %1020 = vmatprep.subr.bf16.mxu0 %v767
    %1021 = vmatpush1.bf16.msra.mxu0 %v766
    %1022 = vmatprep.subr.bf16.mxu0 %v771
    %1023 = vmatpush1.bf16.msra.mxu0 %v770
    %1024 = vmatprep.subr.bf16.mxu0 %v775
    %1025 = vmatpush1.bf16.msra.mxu0 %v774
    %1026 = vmatprep.subr.bf16.mxu0 %v779
    %1027 = vmatpush1.bf16.msra.mxu0 %v778
    %1028 = vmatprep.subr.bf16.mxu0 %v783
    %1029 = vmatpush1.bf16.msra.mxu0 %v782
    %1030 = vmatprep.subr.bf16.mxu0 %v787
    %1031 = vmatpush1.bf16.msra.mxu0 %v786
    %1032 = vmatprep.subr.bf16.mxu0 %v791
    %1033 = vmatpush1.bf16.msra.mxu0 %v790
    %1034 = vmatprep.subr.bf16.mxu0 %v795
    %1035 = vmatpush1.bf16.msra.mxu0 %v794
    %1036 = vmatprep.subr.bf16.mxu0 %v799
    %1037 = vmatpush1.bf16.msra.mxu0 %v798
    %1038 = vmatprep.subr.bf16.mxu0 %v803
    %1039 = vmatpush1.bf16.msra.mxu0 %v802
    %1040 = vmatprep.subr.bf16.mxu0 %v807
    %1041 = vmatpush1.bf16.msra.mxu0 %v806
    %1042 = vmatprep.subr.bf16.mxu0 %v811
    %1043 = vmatpush1.bf16.msra.mxu0 %v810
    %1044 = vmatprep.subr.bf16.mxu0 %v815
    %1045 = vmatpush1.bf16.msra.mxu0 %v814
    %1046 = vmatprep.subr.bf16.mxu0 %v819
    %1047 = vmatpush1.bf16.msra.mxu0 %v818
    %1048 = vmatprep.subr.bf16.mxu0 %v823
    %1049 = vmatpush1.bf16.msra.mxu0 %v822
    %1050 = vmatprep.mubr.bf16.mxu0 %v225
    %1051 = vmatmul.mubr.bf16.gmra.mrb[0].mxu0 %v224
    %v1052 = vpop.f32.mrb[0].mxu0
    %v1053 = vadd.f32 %v361, %v1052
    %v1054 = vpop.f32.mrb[0].mxu0
    %v1055 = vadd.f32 %v365, %v1054
    %v1056 = vpop.f32.mrb[0].mxu0
    %v1057 = vpop.f32.mrb[0].mxu0
    %1058 = vdwg.mxu0
    %1059 = vmatprep.subr.bf16.mxu0 %v827
    %1060 = vmatpush1.bf16.msra.mxu0 %v826
    %1061 = vmatprep.subr.bf16.mxu0 %v831
    %1062 = vmatpush1.bf16.msra.mxu0 %v830
    %1063 = vmatprep.subr.bf16.mxu0 %v835
    %1064 = vmatpush1.bf16.msra.mxu0 %v834
    %1065 = vmatprep.subr.bf16.mxu0 %v839
    %1066 = vmatpush1.bf16.msra.mxu0 %v838
    %1067 = vmatprep.subr.bf16.mxu0 %v843
    %1068 = vmatpush1.bf16.msra.mxu0 %v842
    %1069 = vmatprep.subr.bf16.mxu0 %v847
    %1070 = vmatpush1.bf16.msra.mxu0 %v846
    %1071 = vmatprep.subr.bf16.mxu0 %v851
    %1072 = vmatpush1.bf16.msra.mxu0 %v850
    %1073 = vmatprep.subr.bf16.mxu0 %v855
    %1074 = vmatpush1.bf16.msra.mxu0 %v854
    %1075 = vmatprep.subr.bf16.mxu0 %v859
    %1076 = vmatpush1.bf16.msra.mxu0 %v858
    %1077 = vmatprep.subr.bf16.mxu0 %v863
    %1078 = vmatpush1.bf16.msra.mxu0 %v862
    %1079 = vmatprep.subr.bf16.mxu0 %v867
    %1080 = vmatpush1.bf16.msra.mxu0 %v866
    %1081 = vmatprep.subr.bf16.mxu0 %v871
    %1082 = vmatpush1.bf16.msra.mxu0 %v870
    %1083 = vmatprep.subr.bf16.mxu0 %v875
    %1084 = vmatpush1.bf16.msra.mxu0 %v874
    %1085 = vmatprep.subr.bf16.mxu0 %v879
    %1086 = vmatpush1.bf16.msra.mxu0 %v878
    %1087 = vmatprep.subr.bf16.mxu0 %v883
    %1088 = vmatpush1.bf16.msra.mxu0 %v882
    %1089 = vmatprep.subr.bf16.mxu0 %v887
    %1090 = vmatpush1.bf16.msra.mxu0 %v886
    %1091 = vmatprep.mubr.bf16.mxu0 %v227
    %1092 = vmatmul.mubr.bf16.gmra.mrb[0].mxu0 %v226
    %v1093 = vpop.f32.mrb[0].mxu0
    %v1094 = vadd.f32 %v1053, %v1093
    %v1095 = vpop.f32.mrb[0].mxu0
    %v1096 = vadd.f32 %v1055, %v1095
    %v1097 = vpop.f32.mrb[0].mxu0
    %v1098 = vpop.f32.mrb[0].mxu0
    %1099 = vdwg.mxu0
    %1100 = vmatprep.subr.bf16.mxu0 %v765
    %1101 = vmatpush1.bf16.msra.mxu0 %v764
    %1102 = vmatprep.subr.bf16.mxu0 %v769
    %1103 = vmatpush1.bf16.msra.mxu0 %v768
    %1104 = vmatprep.subr.bf16.mxu0 %v773
    %1105 = vmatpush1.bf16.msra.mxu0 %v772
    %1106 = vmatprep.subr.bf16.mxu0 %v777
    %1107 = vmatpush1.bf16.msra.mxu0 %v776
    %1108 = vmatprep.subr.bf16.mxu0 %v781
    %1109 = vmatpush1.bf16.msra.mxu0 %v780
    %1110 = vmatprep.subr.bf16.mxu0 %v785
    %1111 = vmatpush1.bf16.msra.mxu0 %v784
    %1112 = vmatprep.subr.bf16.mxu0 %v789
    %1113 = vmatpush1.bf16.msra.mxu0 %v788
    %1114 = vmatprep.subr.bf16.mxu0 %v793
    %1115 = vmatpush1.bf16.msra.mxu0 %v792
    %1116 = vmatprep.subr.bf16.mxu0 %v797
    %1117 = vmatpush1.bf16.msra.mxu0 %v796
    %1118 = vmatprep.subr.bf16.mxu0 %v801
    %1119 = vmatpush1.bf16.msra.mxu0 %v800
    %1120 = vmatprep.subr.bf16.mxu0 %v805
    %1121 = vmatpush1.bf16.msra.mxu0 %v804
    %1122 = vmatprep.subr.bf16.mxu0 %v809
    %1123 = vmatpush1.bf16.msra.mxu0 %v808
    %1124 = vmatprep.subr.bf16.mxu0 %v813
    %1125 = vmatpush1.bf16.msra.mxu0 %v812
    %1126 = vmatprep.subr.bf16.mxu0 %v817
    %1127 = vmatpush1.bf16.msra.mxu0 %v816
    %1128 = vmatprep.subr.bf16.mxu0 %v821
    %1129 = vmatpush1.bf16.msra.mxu0 %v820
    %1130 = vmatprep.subr.bf16.mxu0 %v825
    %1131 = vmatpush1.bf16.msra.mxu0 %v824
    %1132 = vmatprep.mubr.bf16.mxu0 %v225
    %1133 = vmatmul.mubr.bf16.gmra.mrb[0].mxu0 %v224
    %v1134 = vpop.f32.mrb[0].mxu0
    %v1135 = vadd.f32 %v369, %v1134
    %v1136 = vpop.f32.mrb[0].mxu0
    %v1137 = vadd.f32 %v373, %v1136
    %v1138 = vpop.f32.mrb[0].mxu0
    %v1139 = vpop.f32.mrb[0].mxu0
    %1140 = vdwg.mxu0
    %1141 = vmatprep.subr.bf16.mxu0 %v829
    %1142 = vmatpush1.bf16.msra.mxu0 %v828
    %1143 = vmatprep.subr.bf16.mxu0 %v833
    %1144 = vmatpush1.bf16.msra.mxu0 %v832
    %1145 = vmatprep.subr.bf16.mxu0 %v837
    %1146 = vmatpush1.bf16.msra.mxu0 %v836
    %1147 = vmatprep.subr.bf16.mxu0 %v841
    %1148 = vmatpush1.bf16.msra.mxu0 %v840
    %1149 = vmatprep.subr.bf16.mxu0 %v845
    %1150 = vmatpush1.bf16.msra.mxu0 %v844
    %1151 = vmatprep.subr.bf16.mxu0 %v849
    %1152 = vmatpush1.bf16.msra.mxu0 %v848
    %1153 = vmatprep.subr.bf16.mxu0 %v853
    %1154 = vmatpush1.bf16.msra.mxu0 %v852
    %1155 = vmatprep.subr.bf16.mxu0 %v857
    %1156 = vmatpush1.bf16.msra.mxu0 %v856
    %1157 = vmatprep.subr.bf16.mxu0 %v861
    %1158 = vmatpush1.bf16.msra.mxu0 %v860
    %1159 = vmatprep.subr.bf16.mxu0 %v865
    %1160 = vmatpush1.bf16.msra.mxu0 %v864
    %1161 = vmatprep.subr.bf16.mxu0 %v869
    %1162 = vmatpush1.bf16.msra.mxu0 %v868
    %1163 = vmatprep.subr.bf16.mxu0 %v873
    %1164 = vmatpush1.bf16.msra.mxu0 %v872
    %1165 = vmatprep.subr.bf16.mxu0 %v877
    %1166 = vmatpush1.bf16.msra.mxu0 %v876
    %1167 = vmatprep.subr.bf16.mxu0 %v881
    %1168 = vmatpush1.bf16.msra.mxu0 %v880
    %1169 = vmatprep.subr.bf16.mxu0 %v885
    %1170 = vmatpush1.bf16.msra.mxu0 %v884
    %1171 = vmatprep.subr.bf16.mxu0 %v889
    %1172 = vmatpush1.bf16.msra.mxu0 %v888
    %1173 = vmatprep.mubr.bf16.mxu0 %v227
    %1174 = vmatmul.mubr.bf16.gmra.mrb[0].mxu0 %v226
    %v1175 = vpop.f32.mrb[0].mxu0
    %v1176 = vadd.f32 %v1135, %v1175
    %v1177 = vpop.f32.mrb[0].mxu0
    %v1178 = vadd.f32 %v1137, %v1177
    %v1179 = vpop.f32.mrb[0].mxu0
    %v1180 = vpop.f32.mrb[0].mxu0
    %1181 = vdwg.mxu0
    %v1182 = vmax.f32 %v1094, 0.0
    %v1183 = vmax.f32 %v1096, 0.0
    %v1184 = vmax.f32 %v1176, 0.0
    %v1185 = vmax.f32 %v1178, 0.0
    %v1186 = vpack.c.bf16 %v1182, %v1182
    %v1187 = vpack.c.bf16 %v1183, %v1183
    %v1188 = vpack.c.bf16 %v1184, %v1184
    %v1189 = vpack.c.bf16 %v1185, %v1185
    %v1190 = vld [vmem:[#allocation12] sm:$0xff]
    %v1191 = vld [vmem:[#allocation12 + $0x8] sm:$0xff]
    %v1192 = vld [vmem:[#allocation12 + $0x10] sm:$0xff]
    %v1193 = vld [vmem:[#allocation12 + $0x18] sm:$0xff]
    %v1194 = vld [vmem:[#allocation12 + $0x20] sm:$0xff]
    %v1195 = vld [vmem:[#allocation12 + $0x28] sm:$0xff]
    %v1196 = vld [vmem:[#allocation12 + $0x30] sm:$0xff]
    %v1197 = vld [vmem:[#allocation12 + $0x38] sm:$0xff]
    %v1198 = vld [vmem:[#allocation12 + $0x40] sm:$0xff]
    %v1199 = vld [vmem:[#allocation12 + $0x48] sm:$0xff]
    %v1200 = vld [vmem:[#allocation12 + $0x50] sm:$0xff]
    %v1201 = vld [vmem:[#allocation12 + $0x58] sm:$0xff]
    %v1202 = vld [vmem:[#allocation12 + $0x60] sm:$0xff]
    %v1203 = vld [vmem:[#allocation12 + $0x68] sm:$0xff]
    %v1204 = vld [vmem:[#allocation12 + $0x70] sm:$0xff]
    %v1205 = vld [vmem:[#allocation12 + $0x78] sm:$0xff]
    %v1206 = vld [vmem:[#allocation12 + $0x80] sm:$0xff]
    %v1207 = vld [vmem:[#allocation12 + $0x88] sm:$0xff]
    %v1208 = vld [vmem:[#allocation12 + $0x90] sm:$0xff]
    %v1209 = vld [vmem:[#allocation12 + $0x98] sm:$0xff]
    %v1210 = vld [vmem:[#allocation12 + $0xa0] sm:$0xff]
    %v1211 = vld [vmem:[#allocation12 + $0xa8] sm:$0xff]
    %v1212 = vld [vmem:[#allocation12 + $0xb0] sm:$0xff]
    %v1213 = vld [vmem:[#allocation12 + $0xb8] sm:$0xff]
    %v1214 = vld [vmem:[#allocation12 + $0xc0] sm:$0xff]
    %v1215 = vld [vmem:[#allocation12 + $0xc8] sm:$0xff]
    %v1216 = vld [vmem:[#allocation12 + $0xd0] sm:$0xff]
    %v1217 = vld [vmem:[#allocation12 + $0xd8] sm:$0xff]
    %v1218 = vld [vmem:[#allocation12 + $0xe0] sm:$0xff]
    %v1219 = vld [vmem:[#allocation12 + $0xe8] sm:$0xff]
    %v1220 = vld [vmem:[#allocation12 + $0xf0] sm:$0xff]
    %v1221 = vld [vmem:[#allocation12 + $0xf8] sm:$0xff]
    %v1222 = vld [vmem:[#allocation12 + $0x100] sm:$0xff]
    %v1223 = vld [vmem:[#allocation12 + $0x108] sm:$0xff]
    %v1224 = vld [vmem:[#allocation12 + $0x110] sm:$0xff]
    %v1225 = vld [vmem:[#allocation12 + $0x118] sm:$0xff]
    %v1226 = vld [vmem:[#allocation12 + $0x120] sm:$0xff]
    %v1227 = vld [vmem:[#allocation12 + $0x128] sm:$0xff]
    %v1228 = vld [vmem:[#allocation12 + $0x130] sm:$0xff]
    %v1229 = vld [vmem:[#allocation12 + $0x138] sm:$0xff]
    %v1230 = vld [vmem:[#allocation12 + $0x140] sm:$0xff]
    %v1231 = vld [vmem:[#allocation12 + $0x148] sm:$0xff]
    %v1232 = vld [vmem:[#allocation12 + $0x150] sm:$0xff]
    %v1233 = vld [vmem:[#allocation12 + $0x158] sm:$0xff]
    %v1234 = vld [vmem:[#allocation12 + $0x160] sm:$0xff]
    %v1235 = vld [vmem:[#allocation12 + $0x168] sm:$0xff]
    %v1236 = vld [vmem:[#allocation12 + $0x170] sm:$0xff]
    %v1237 = vld [vmem:[#allocation12 + $0x178] sm:$0xff]
    %v1238 = vld [vmem:[#allocation12 + $0x180] sm:$0xff]
    %v1239 = vld [vmem:[#allocation12 + $0x188] sm:$0xff]
    %v1240 = vld [vmem:[#allocation12 + $0x190] sm:$0xff]
    %v1241 = vld [vmem:[#allocation12 + $0x198] sm:$0xff]
    %v1242 = vld [vmem:[#allocation12 + $0x1a0] sm:$0xff]
    %v1243 = vld [vmem:[#allocation12 + $0x1a8] sm:$0xff]
    %v1244 = vld [vmem:[#allocation12 + $0x1b0] sm:$0xff]
    %v1245 = vld [vmem:[#allocation12 + $0x1b8] sm:$0xff]
    %v1246 = vld [vmem:[#allocation12 + $0x1c0] sm:$0xff]
    %v1247 = vld [vmem:[#allocation12 + $0x1c8] sm:$0xff]
    %v1248 = vld [vmem:[#allocation12 + $0x1d0] sm:$0xff]
    %v1249 = vld [vmem:[#allocation12 + $0x1d8] sm:$0xff]
    %v1250 = vld [vmem:[#allocation12 + $0x1e0] sm:$0xff]
    %v1251 = vld [vmem:[#allocation12 + $0x1e8] sm:$0xff]
    %v1252 = vld [vmem:[#allocation12 + $0x1f0] sm:$0xff]
    %v1253 = vld [vmem:[#allocation12 + $0x1f8] sm:$0xff]
    %v1254 = vld [vmem:[#allocation12 + $0x200] sm:$0xff]
    %v1255 = vld [vmem:[#allocation12 + $0x208] sm:$0xff]
    %v1256 = vld [vmem:[#allocation12 + $0x210] sm:$0xff]
    %v1257 = vld [vmem:[#allocation12 + $0x218] sm:$0xff]
    %v1258 = vld [vmem:[#allocation12 + $0x220] sm:$0xff]
    %v1259 = vld [vmem:[#allocation12 + $0x228] sm:$0xff]
    %v1260 = vld [vmem:[#allocation12 + $0x230] sm:$0xff]
    %v1261 = vld [vmem:[#allocation12 + $0x238] sm:$0xff]
    %v1262 = vld [vmem:[#allocation12 + $0x240] sm:$0xff]
    %v1263 = vld [vmem:[#allocation12 + $0x248] sm:$0xff]
    %v1264 = vld [vmem:[#allocation12 + $0x250] sm:$0xff]
    %v1265 = vld [vmem:[#allocation12 + $0x258] sm:$0xff]
    %v1266 = vld [vmem:[#allocation12 + $0x260] sm:$0xff]
    %v1267 = vld [vmem:[#allocation12 + $0x268] sm:$0xff]
    %v1268 = vld [vmem:[#allocation12 + $0x270] sm:$0xff]
    %v1269 = vld [vmem:[#allocation12 + $0x278] sm:$0xff]
    %v1270 = vld [vmem:[#allocation12 + $0x280] sm:$0xff]
    %v1271 = vld [vmem:[#allocation12 + $0x288] sm:$0xff]
    %v1272 = vld [vmem:[#allocation12 + $0x290] sm:$0xff]
    %v1273 = vld [vmem:[#allocation12 + $0x298] sm:$0xff]
    %v1274 = vld [vmem:[#allocation12 + $0x2a0] sm:$0xff]
    %v1275 = vld [vmem:[#allocation12 + $0x2a8] sm:$0xff]
    %v1276 = vld [vmem:[#allocation12 + $0x2b0] sm:$0xff]
    %v1277 = vld [vmem:[#allocation12 + $0x2b8] sm:$0xff]
    %v1278 = vld [vmem:[#allocation12 + $0x2c0] sm:$0xff]
    %v1279 = vld [vmem:[#allocation12 + $0x2c8] sm:$0xff]
    %v1280 = vld [vmem:[#allocation12 + $0x2d0] sm:$0xff]
    %v1281 = vld [vmem:[#allocation12 + $0x2d8] sm:$0xff]
    %v1282 = vld [vmem:[#allocation12 + $0x2e0] sm:$0xff]
    %v1283 = vld [vmem:[#allocation12 + $0x2e8] sm:$0xff]
    %v1284 = vld [vmem:[#allocation12 + $0x2f0] sm:$0xff]
    %v1285 = vld [vmem:[#allocation12 + $0x2f8] sm:$0xff]
    %v1286 = vld [vmem:[#allocation12 + $0x300] sm:$0xff]
    %v1287 = vld [vmem:[#allocation12 + $0x308] sm:$0xff]
    %v1288 = vld [vmem:[#allocation12 + $0x310] sm:$0xff]
    %v1289 = vld [vmem:[#allocation12 + $0x318] sm:$0xff]
    %v1290 = vld [vmem:[#allocation12 + $0x320] sm:$0xff]
    %v1291 = vld [vmem:[#allocation12 + $0x328] sm:$0xff]
    %v1292 = vld [vmem:[#allocation12 + $0x330] sm:$0xff]
    %v1293 = vld [vmem:[#allocation12 + $0x338] sm:$0xff]
    %v1294 = vld [vmem:[#allocation12 + $0x340] sm:$0xff]
    %v1295 = vld [vmem:[#allocation12 + $0x348] sm:$0xff]
    %v1296 = vld [vmem:[#allocation12 + $0x350] sm:$0xff]
    %v1297 = vld [vmem:[#allocation12 + $0x358] sm:$0xff]
    %v1298 = vld [vmem:[#allocation12 + $0x360] sm:$0xff]
    %v1299 = vld [vmem:[#allocation12 + $0x368] sm:$0xff]
    %v1300 = vld [vmem:[#allocation12 + $0x370] sm:$0xff]
    %v1301 = vld [vmem:[#allocation12 + $0x378] sm:$0xff]
    %v1302 = vld [vmem:[#allocation12 + $0x380] sm:$0xff]
    %v1303 = vld [vmem:[#allocation12 + $0x388] sm:$0xff]
    %v1304 = vld [vmem:[#allocation12 + $0x390] sm:$0xff]
    %v1305 = vld [vmem:[#allocation12 + $0x398] sm:$0xff]
    %v1306 = vld [vmem:[#allocation12 + $0x3a0] sm:$0xff]
    %v1307 = vld [vmem:[#allocation12 + $0x3a8] sm:$0xff]
    %v1308 = vld [vmem:[#allocation12 + $0x3b0] sm:$0xff]
    %v1309 = vld [vmem:[#allocation12 + $0x3b8] sm:$0xff]
    %v1310 = vld [vmem:[#allocation12 + $0x3c0] sm:$0xff]
    %v1311 = vld [vmem:[#allocation12 + $0x3c8] sm:$0xff]
    %v1312 = vld [vmem:[#allocation12 + $0x3d0] sm:$0xff]
    %v1313 = vld [vmem:[#allocation12 + $0x3d8] sm:$0xff]
    %v1314 = vld [vmem:[#allocation12 + $0x3e0] sm:$0xff]
    %v1315 = vld [vmem:[#allocation12 + $0x3e8] sm:$0xff]
    %v1316 = vld [vmem:[#allocation12 + $0x3f0] sm:$0xff]
    %v1317 = vld [vmem:[#allocation12 + $0x3f8] sm:$0xff]
    %v1318 = vld [vmem:[#allocation12 + $0x400] sm:$0xff]
    %v1319 = vld [vmem:[#allocation12 + $0x408] sm:$0xff]
    %v1320 = vld [vmem:[#allocation12 + $0x410] sm:$0xff]
    %v1321 = vld [vmem:[#allocation12 + $0x418] sm:$0xff]
    %v1322 = vld [vmem:[#allocation12 + $0x420] sm:$0xff]
    %v1323 = vld [vmem:[#allocation12 + $0x428] sm:$0xff]
    %v1324 = vld [vmem:[#allocation12 + $0x430] sm:$0xff]
    %v1325 = vld [vmem:[#allocation12 + $0x438] sm:$0xff]
    %v1326 = vld [vmem:[#allocation12 + $0x440] sm:$0xff]
    %v1327 = vld [vmem:[#allocation12 + $0x448] sm:$0xff]
    %v1328 = vld [vmem:[#allocation12 + $0x450] sm:$0xff]
    %v1329 = vld [vmem:[#allocation12 + $0x458] sm:$0xff]
    %v1330 = vld [vmem:[#allocation12 + $0x460] sm:$0xff]
    %v1331 = vld [vmem:[#allocation12 + $0x468] sm:$0xff]
    %v1332 = vld [vmem:[#allocation12 + $0x470] sm:$0xff]
    %v1333 = vld [vmem:[#allocation12 + $0x478] sm:$0xff]
    %v1334 = vld [vmem:[#allocation12 + $0x480] sm:$0xff]
    %v1335 = vld [vmem:[#allocation12 + $0x488] sm:$0xff]
    %v1336 = vld [vmem:[#allocation12 + $0x490] sm:$0xff]
    %v1337 = vld [vmem:[#allocation12 + $0x498] sm:$0xff]
    %v1338 = vld [vmem:[#allocation12 + $0x4a0] sm:$0xff]
    %v1339 = vld [vmem:[#allocation12 + $0x4a8] sm:$0xff]
    %v1340 = vld [vmem:[#allocation12 + $0x4b0] sm:$0xff]
    %v1341 = vld [vmem:[#allocation12 + $0x4b8] sm:$0xff]
    %v1342 = vld [vmem:[#allocation12 + $0x4c0] sm:$0xff]
    %v1343 = vld [vmem:[#allocation12 + $0x4c8] sm:$0xff]
    %v1344 = vld [vmem:[#allocation12 + $0x4d0] sm:$0xff]
    %v1345 = vld [vmem:[#allocation12 + $0x4d8] sm:$0xff]
    %v1346 = vld [vmem:[#allocation12 + $0x4e0] sm:$0xff]
    %v1347 = vld [vmem:[#allocation12 + $0x4e8] sm:$0xff]
    %v1348 = vld [vmem:[#allocation12 + $0x4f0] sm:$0xff]
    %v1349 = vld [vmem:[#allocation12 + $0x4f8] sm:$0xff]
    %v1350 = vld [vmem:[#allocation12 + $0x500] sm:$0xff]
    %v1351 = vld [vmem:[#allocation12 + $0x508] sm:$0xff]
    %v1352 = vld [vmem:[#allocation12 + $0x510] sm:$0xff]
    %v1353 = vld [vmem:[#allocation12 + $0x518] sm:$0xff]
    %v1354 = vld [vmem:[#allocation12 + $0x520] sm:$0xff]
    %v1355 = vld [vmem:[#allocation12 + $0x528] sm:$0xff]
    %v1356 = vld [vmem:[#allocation12 + $0x530] sm:$0xff]
    %v1357 = vld [vmem:[#allocation12 + $0x538] sm:$0xff]
    %v1358 = vld [vmem:[#allocation12 + $0x540] sm:$0xff]
    %v1359 = vld [vmem:[#allocation12 + $0x548] sm:$0xff]
    %v1360 = vld [vmem:[#allocation12 + $0x550] sm:$0xff]
    %v1361 = vld [vmem:[#allocation12 + $0x558] sm:$0xff]
    %v1362 = vld [vmem:[#allocation12 + $0x560] sm:$0xff]
    %v1363 = vld [vmem:[#allocation12 + $0x568] sm:$0xff]
    %v1364 = vld [vmem:[#allocation12 + $0x570] sm:$0xff]
    %v1365 = vld [vmem:[#allocation12 + $0x578] sm:$0xff]
    %v1366 = vld [vmem:[#allocation12 + $0x580] sm:$0xff]
    %v1367 = vld [vmem:[#allocation12 + $0x588] sm:$0xff]
    %v1368 = vld [vmem:[#allocation12 + $0x590] sm:$0xff]
    %v1369 = vld [vmem:[#allocation12 + $0x598] sm:$0xff]
    %v1370 = vld [vmem:[#allocation12 + $0x5a0] sm:$0xff]
    %v1371 = vld [vmem:[#allocation12 + $0x5a8] sm:$0xff]
    %v1372 = vld [vmem:[#allocation12 + $0x5b0] sm:$0xff]
    %v1373 = vld [vmem:[#allocation12 + $0x5b8] sm:$0xff]
    %v1374 = vld [vmem:[#allocation12 + $0x5c0] sm:$0xff]
    %v1375 = vld [vmem:[#allocation12 + $0x5c8] sm:$0xff]
    %v1376 = vld [vmem:[#allocation12 + $0x5d0] sm:$0xff]
    %v1377 = vld [vmem:[#allocation12 + $0x5d8] sm:$0xff]
    %v1378 = vld [vmem:[#allocation12 + $0x5e0] sm:$0xff]
    %v1379 = vld [vmem:[#allocation12 + $0x5e8] sm:$0xff]
    %v1380 = vld [vmem:[#allocation12 + $0x5f0] sm:$0xff]
    %v1381 = vld [vmem:[#allocation12 + $0x5f8] sm:$0xff]
    %v1382 = vld [vmem:[#allocation12 + $0x600] sm:$0xff]
    %v1383 = vld [vmem:[#allocation12 + $0x608] sm:$0xff]
    %v1384 = vld [vmem:[#allocation12 + $0x610] sm:$0xff]
    %v1385 = vld [vmem:[#allocation12 + $0x618] sm:$0xff]
    %v1386 = vld [vmem:[#allocation12 + $0x620] sm:$0xff]
    %v1387 = vld [vmem:[#allocation12 + $0x628] sm:$0xff]
    %v1388 = vld [vmem:[#allocation12 + $0x630] sm:$0xff]
    %v1389 = vld [vmem:[#allocation12 + $0x638] sm:$0xff]
    %v1390 = vld [vmem:[#allocation12 + $0x640] sm:$0xff]
    %v1391 = vld [vmem:[#allocation12 + $0x648] sm:$0xff]
    %v1392 = vld [vmem:[#allocation12 + $0x650] sm:$0xff]
    %v1393 = vld [vmem:[#allocation12 + $0x658] sm:$0xff]
    %v1394 = vld [vmem:[#allocation12 + $0x660] sm:$0xff]
    %v1395 = vld [vmem:[#allocation12 + $0x668] sm:$0xff]
    %v1396 = vld [vmem:[#allocation12 + $0x670] sm:$0xff]
    %v1397 = vld [vmem:[#allocation12 + $0x678] sm:$0xff]
    %v1398 = vld [vmem:[#allocation12 + $0x680] sm:$0xff]
    %v1399 = vld [vmem:[#allocation12 + $0x688] sm:$0xff]
    %v1400 = vld [vmem:[#allocation12 + $0x690] sm:$0xff]
    %v1401 = vld [vmem:[#allocation12 + $0x698] sm:$0xff]
    %v1402 = vld [vmem:[#allocation12 + $0x6a0] sm:$0xff]
    %v1403 = vld [vmem:[#allocation12 + $0x6a8] sm:$0xff]
    %v1404 = vld [vmem:[#allocation12 + $0x6b0] sm:$0xff]
    %v1405 = vld [vmem:[#allocation12 + $0x6b8] sm:$0xff]
    %v1406 = vld [vmem:[#allocation12 + $0x6c0] sm:$0xff]
    %v1407 = vld [vmem:[#allocation12 + $0x6c8] sm:$0xff]
    %v1408 = vld [vmem:[#allocation12 + $0x6d0] sm:$0xff]
    %v1409 = vld [vmem:[#allocation12 + $0x6d8] sm:$0xff]
    %v1410 = vld [vmem:[#allocation12 + $0x6e0] sm:$0xff]
    %v1411 = vld [vmem:[#allocation12 + $0x6e8] sm:$0xff]
    %v1412 = vld [vmem:[#allocation12 + $0x6f0] sm:$0xff]
    %v1413 = vld [vmem:[#allocation12 + $0x6f8] sm:$0xff]
    %v1414 = vld [vmem:[#allocation12 + $0x700] sm:$0xff]
    %v1415 = vld [vmem:[#allocation12 + $0x708] sm:$0xff]
    %v1416 = vld [vmem:[#allocation12 + $0x710] sm:$0xff]
    %v1417 = vld [vmem:[#allocation12 + $0x718] sm:$0xff]
    %v1418 = vld [vmem:[#allocation12 + $0x720] sm:$0xff]
    %v1419 = vld [vmem:[#allocation12 + $0x728] sm:$0xff]
    %v1420 = vld [vmem:[#allocation12 + $0x730] sm:$0xff]
    %v1421 = vld [vmem:[#allocation12 + $0x738] sm:$0xff]
    %v1422 = vld [vmem:[#allocation12 + $0x740] sm:$0xff]
    %v1423 = vld [vmem:[#allocation12 + $0x748] sm:$0xff]
    %v1424 = vld [vmem:[#allocation12 + $0x750] sm:$0xff]
    %v1425 = vld [vmem:[#allocation12 + $0x758] sm:$0xff]
    %v1426 = vld [vmem:[#allocation12 + $0x760] sm:$0xff]
    %v1427 = vld [vmem:[#allocation12 + $0x768] sm:$0xff]
    %v1428 = vld [vmem:[#allocation12 + $0x770] sm:$0xff]
    %v1429 = vld [vmem:[#allocation12 + $0x778] sm:$0xff]
    %v1430 = vld [vmem:[#allocation12 + $0x780] sm:$0xff]
    %v1431 = vld [vmem:[#allocation12 + $0x788] sm:$0xff]
    %v1432 = vld [vmem:[#allocation12 + $0x790] sm:$0xff]
    %v1433 = vld [vmem:[#allocation12 + $0x798] sm:$0xff]
    %v1434 = vld [vmem:[#allocation12 + $0x7a0] sm:$0xff]
    %v1435 = vld [vmem:[#allocation12 + $0x7a8] sm:$0xff]
    %v1436 = vld [vmem:[#allocation12 + $0x7b0] sm:$0xff]
    %v1437 = vld [vmem:[#allocation12 + $0x7b8] sm:$0xff]
    %v1438 = vld [vmem:[#allocation12 + $0x7c0] sm:$0xff]
    %v1439 = vld [vmem:[#allocation12 + $0x7c8] sm:$0xff]
    %v1440 = vld [vmem:[#allocation12 + $0x7d0] sm:$0xff]
    %v1441 = vld [vmem:[#allocation12 + $0x7d8] sm:$0xff]
    %v1442 = vld [vmem:[#allocation12 + $0x7e0] sm:$0xff]
    %v1443 = vld [vmem:[#allocation12 + $0x7e8] sm:$0xff]
    %v1444 = vld [vmem:[#allocation12 + $0x7f0] sm:$0xff]
    %v1445 = vld [vmem:[#allocation12 + $0x7f8] sm:$0xff]
    %v1446 = vld [vmem:[#allocation14] sm:$0xff]
    %v1448 = vlaneseq
    %v1449 = vshrl.u32 %v1448, 7
    %v1450 = vsub.s32 0, %v1449
    %v1451 = vrot.slane %v1446, %v1450
    %v1452 = vlaneseq
    %v1453 = vshrl.u32 %v1452, 7
    %v1454 = vsub.s32 1, %v1453
    %v1455 = vrot.slane %v1446, %v1454
    %v1456 = vlaneseq
    %v1457 = vshrl.u32 %v1456, 7
    %v1458 = vsub.s32 2, %v1457
    %v1459 = vrot.slane %v1446, %v1458
    %v1460 = vlaneseq
    %v1461 = vshrl.u32 %v1460, 7
    %v1462 = vsub.s32 3, %v1461
    %v1463 = vrot.slane %v1446, %v1462
    %v1464 = vlaneseq
    %v1465 = vshrl.u32 %v1464, 7
    %v1466 = vsub.s32 4, %v1465
    %v1467 = vrot.slane %v1446, %v1466
    %v1468 = vlaneseq
    %v1469 = vshrl.u32 %v1468, 7
    %v1470 = vsub.s32 5, %v1469
    %v1471 = vrot.slane %v1446, %v1470
    %v1472 = vlaneseq
    %v1473 = vshrl.u32 %v1472, 7
    %v1474 = vsub.s32 6, %v1473
    %v1475 = vrot.slane %v1446, %v1474
    %v1476 = vlaneseq
    %v1477 = vshrl.u32 %v1476, 7
    %v1478 = vsub.s32 7, %v1477
    %v1479 = vrot.slane %v1446, %v1478
    %v1744 = vunpack.c.l.b16 %v1190
    %v1745 = vunpack.c.h.b16 %v1190
    %v1746 = vunpack.c.l.b16 %v1191
    %v1747 = vunpack.c.h.b16 %v1191
    %v1748 = vunpack.c.l.b16 %v1192
    %v1749 = vunpack.c.h.b16 %v1192
    %v1750 = vunpack.c.l.b16 %v1193
    %v1751 = vunpack.c.h.b16 %v1193
    %v1752 = vunpack.c.l.b16 %v1194
    %v1753 = vunpack.c.h.b16 %v1194
    %v1754 = vunpack.c.l.b16 %v1195
    %v1755 = vunpack.c.h.b16 %v1195
    %v1756 = vunpack.c.l.b16 %v1196
    %v1757 = vunpack.c.h.b16 %v1196
    %v1758 = vunpack.c.l.b16 %v1197
    %v1759 = vunpack.c.h.b16 %v1197
    %v1760 = vunpack.c.l.b16 %v1198
    %v1761 = vunpack.c.h.b16 %v1198
    %v1762 = vunpack.c.l.b16 %v1199
    %v1763 = vunpack.c.h.b16 %v1199
    %v1764 = vunpack.c.l.b16 %v1200
    %v1765 = vunpack.c.h.b16 %v1200
    %v1766 = vunpack.c.l.b16 %v1201
    %v1767 = vunpack.c.h.b16 %v1201
    %v1768 = vunpack.c.l.b16 %v1202
    %v1769 = vunpack.c.h.b16 %v1202
    %v1770 = vunpack.c.l.b16 %v1203
    %v1771 = vunpack.c.h.b16 %v1203
    %v1772 = vunpack.c.l.b16 %v1204
    %v1773 = vunpack.c.h.b16 %v1204
    %v1774 = vunpack.c.l.b16 %v1205
    %v1775 = vunpack.c.h.b16 %v1205
    %v1776 = vunpack.c.l.b16 %v1206
    %v1777 = vunpack.c.h.b16 %v1206
    %v1778 = vunpack.c.l.b16 %v1207
    %v1779 = vunpack.c.h.b16 %v1207
    %v1780 = vunpack.c.l.b16 %v1208
    %v1781 = vunpack.c.h.b16 %v1208
    %v1782 = vunpack.c.l.b16 %v1209
    %v1783 = vunpack.c.h.b16 %v1209
    %v1784 = vunpack.c.l.b16 %v1210
    %v1785 = vunpack.c.h.b16 %v1210
    %v1786 = vunpack.c.l.b16 %v1211
    %v1787 = vunpack.c.h.b16 %v1211
    %v1788 = vunpack.c.l.b16 %v1212
    %v1789 = vunpack.c.h.b16 %v1212
    %v1790 = vunpack.c.l.b16 %v1213
    %v1791 = vunpack.c.h.b16 %v1213
    %v1792 = vunpack.c.l.b16 %v1214
    %v1793 = vunpack.c.h.b16 %v1214
    %v1794 = vunpack.c.l.b16 %v1215
    %v1795 = vunpack.c.h.b16 %v1215
    %v1796 = vunpack.c.l.b16 %v1216
    %v1797 = vunpack.c.h.b16 %v1216
    %v1798 = vunpack.c.l.b16 %v1217
    %v1799 = vunpack.c.h.b16 %v1217
    %v1800 = vunpack.c.l.b16 %v1218
    %v1801 = vunpack.c.h.b16 %v1218
    %v1802 = vunpack.c.l.b16 %v1219
    %v1803 = vunpack.c.h.b16 %v1219
    %v1804 = vunpack.c.l.b16 %v1220
    %v1805 = vunpack.c.h.b16 %v1220
    %v1806 = vunpack.c.l.b16 %v1221
    %v1807 = vunpack.c.h.b16 %v1221
    %v1808 = vunpack.c.l.b16 %v1222
    %v1809 = vunpack.c.h.b16 %v1222
    %v1810 = vunpack.c.l.b16 %v1223
    %v1811 = vunpack.c.h.b16 %v1223
    %v1812 = vunpack.c.l.b16 %v1224
    %v1813 = vunpack.c.h.b16 %v1224
    %v1814 = vunpack.c.l.b16 %v1225
    %v1815 = vunpack.c.h.b16 %v1225
    %v1816 = vunpack.c.l.b16 %v1226
    %v1817 = vunpack.c.h.b16 %v1226
    %v1818 = vunpack.c.l.b16 %v1227
    %v1819 = vunpack.c.h.b16 %v1227
    %v1820 = vunpack.c.l.b16 %v1228
    %v1821 = vunpack.c.h.b16 %v1228
    %v1822 = vunpack.c.l.b16 %v1229
    %v1823 = vunpack.c.h.b16 %v1229
    %v1824 = vunpack.c.l.b16 %v1230
    %v1825 = vunpack.c.h.b16 %v1230
    %v1826 = vunpack.c.l.b16 %v1231
    %v1827 = vunpack.c.h.b16 %v1231
    %v1828 = vunpack.c.l.b16 %v1232
    %v1829 = vunpack.c.h.b16 %v1232
    %v1830 = vunpack.c.l.b16 %v1233
    %v1831 = vunpack.c.h.b16 %v1233
    %v1832 = vunpack.c.l.b16 %v1234
    %v1833 = vunpack.c.h.b16 %v1234
    %v1834 = vunpack.c.l.b16 %v1235
    %v1835 = vunpack.c.h.b16 %v1235
    %v1836 = vunpack.c.l.b16 %v1236
    %v1837 = vunpack.c.h.b16 %v1236
    %v1838 = vunpack.c.l.b16 %v1237
    %v1839 = vunpack.c.h.b16 %v1237
    %v1840 = vunpack.c.l.b16 %v1238
    %v1841 = vunpack.c.h.b16 %v1238
    %v1842 = vunpack.c.l.b16 %v1239
    %v1843 = vunpack.c.h.b16 %v1239
    %v1844 = vunpack.c.l.b16 %v1240
    %v1845 = vunpack.c.h.b16 %v1240
    %v1846 = vunpack.c.l.b16 %v1241
    %v1847 = vunpack.c.h.b16 %v1241
    %v1848 = vunpack.c.l.b16 %v1242
    %v1849 = vunpack.c.h.b16 %v1242
    %v1850 = vunpack.c.l.b16 %v1243
    %v1851 = vunpack.c.h.b16 %v1243
    %v1852 = vunpack.c.l.b16 %v1244
    %v1853 = vunpack.c.h.b16 %v1244
    %v1854 = vunpack.c.l.b16 %v1245
    %v1855 = vunpack.c.h.b16 %v1245
    %v1856 = vunpack.c.l.b16 %v1246
    %v1857 = vunpack.c.h.b16 %v1246
    %v1858 = vunpack.c.l.b16 %v1247
    %v1859 = vunpack.c.h.b16 %v1247
    %v1860 = vunpack.c.l.b16 %v1248
    %v1861 = vunpack.c.h.b16 %v1248
    %v1862 = vunpack.c.l.b16 %v1249
    %v1863 = vunpack.c.h.b16 %v1249
    %v1864 = vunpack.c.l.b16 %v1250
    %v1865 = vunpack.c.h.b16 %v1250
    %v1866 = vunpack.c.l.b16 %v1251
    %v1867 = vunpack.c.h.b16 %v1251
    %v1868 = vunpack.c.l.b16 %v1252
    %v1869 = vunpack.c.h.b16 %v1252
    %v1870 = vunpack.c.l.b16 %v1253
    %v1871 = vunpack.c.h.b16 %v1253
    %v1872 = vunpack.c.l.b16 %v1254
    %v1873 = vunpack.c.h.b16 %v1254
    %v1874 = vunpack.c.l.b16 %v1255
    %v1875 = vunpack.c.h.b16 %v1255
    %v1876 = vunpack.c.l.b16 %v1256
    %v1877 = vunpack.c.h.b16 %v1256
    %v1878 = vunpack.c.l.b16 %v1257
    %v1879 = vunpack.c.h.b16 %v1257
    %v1880 = vunpack.c.l.b16 %v1258
    %v1881 = vunpack.c.h.b16 %v1258
    %v1882 = vunpack.c.l.b16 %v1259
    %v1883 = vunpack.c.h.b16 %v1259
    %v1884 = vunpack.c.l.b16 %v1260
    %v1885 = vunpack.c.h.b16 %v1260
    %v1886 = vunpack.c.l.b16 %v1261
    %v1887 = vunpack.c.h.b16 %v1261
    %v1888 = vunpack.c.l.b16 %v1262
    %v1889 = vunpack.c.h.b16 %v1262
    %v1890 = vunpack.c.l.b16 %v1263
    %v1891 = vunpack.c.h.b16 %v1263
    %v1892 = vunpack.c.l.b16 %v1264
    %v1893 = vunpack.c.h.b16 %v1264
    %v1894 = vunpack.c.l.b16 %v1265
    %v1895 = vunpack.c.h.b16 %v1265
    %v1896 = vunpack.c.l.b16 %v1266
    %v1897 = vunpack.c.h.b16 %v1266
    %v1898 = vunpack.c.l.b16 %v1267
    %v1899 = vunpack.c.h.b16 %v1267
    %v1900 = vunpack.c.l.b16 %v1268
    %v1901 = vunpack.c.h.b16 %v1268
    %v1902 = vunpack.c.l.b16 %v1269
    %v1903 = vunpack.c.h.b16 %v1269
    %v1904 = vunpack.c.l.b16 %v1270
    %v1905 = vunpack.c.h.b16 %v1270
    %v1906 = vunpack.c.l.b16 %v1271
    %v1907 = vunpack.c.h.b16 %v1271
    %v1908 = vunpack.c.l.b16 %v1272
    %v1909 = vunpack.c.h.b16 %v1272
    %v1910 = vunpack.c.l.b16 %v1273
    %v1911 = vunpack.c.h.b16 %v1273
    %v1912 = vunpack.c.l.b16 %v1274
    %v1913 = vunpack.c.h.b16 %v1274
    %v1914 = vunpack.c.l.b16 %v1275
    %v1915 = vunpack.c.h.b16 %v1275
    %v1916 = vunpack.c.l.b16 %v1276
    %v1917 = vunpack.c.h.b16 %v1276
    %v1918 = vunpack.c.l.b16 %v1277
    %v1919 = vunpack.c.h.b16 %v1277
    %v1920 = vunpack.c.l.b16 %v1278
    %v1921 = vunpack.c.h.b16 %v1278
    %v1922 = vunpack.c.l.b16 %v1279
    %v1923 = vunpack.c.h.b16 %v1279
    %v1924 = vunpack.c.l.b16 %v1280
    %v1925 = vunpack.c.h.b16 %v1280
    %v1926 = vunpack.c.l.b16 %v1281
    %v1927 = vunpack.c.h.b16 %v1281
    %v1928 = vunpack.c.l.b16 %v1282
    %v1929 = vunpack.c.h.b16 %v1282
    %v1930 = vunpack.c.l.b16 %v1283
    %v1931 = vunpack.c.h.b16 %v1283
    %v1932 = vunpack.c.l.b16 %v1284
    %v1933 = vunpack.c.h.b16 %v1284
    %v1934 = vunpack.c.l.b16 %v1285
    %v1935 = vunpack.c.h.b16 %v1285
    %v1936 = vunpack.c.l.b16 %v1286
    %v1937 = vunpack.c.h.b16 %v1286
    %v1938 = vunpack.c.l.b16 %v1287
    %v1939 = vunpack.c.h.b16 %v1287
    %v1940 = vunpack.c.l.b16 %v1288
    %v1941 = vunpack.c.h.b16 %v1288
    %v1942 = vunpack.c.l.b16 %v1289
    %v1943 = vunpack.c.h.b16 %v1289
    %v1944 = vunpack.c.l.b16 %v1290
    %v1945 = vunpack.c.h.b16 %v1290
    %v1946 = vunpack.c.l.b16 %v1291
    %v1947 = vunpack.c.h.b16 %v1291
    %v1948 = vunpack.c.l.b16 %v1292
    %v1949 = vunpack.c.h.b16 %v1292
    %v1950 = vunpack.c.l.b16 %v1293
    %v1951 = vunpack.c.h.b16 %v1293
    %v1952 = vunpack.c.l.b16 %v1294
    %v1953 = vunpack.c.h.b16 %v1294
    %v1954 = vunpack.c.l.b16 %v1295
    %v1955 = vunpack.c.h.b16 %v1295
    %v1956 = vunpack.c.l.b16 %v1296
    %v1957 = vunpack.c.h.b16 %v1296
    %v1958 = vunpack.c.l.b16 %v1297
    %v1959 = vunpack.c.h.b16 %v1297
    %v1960 = vunpack.c.l.b16 %v1298
    %v1961 = vunpack.c.h.b16 %v1298
    %v1962 = vunpack.c.l.b16 %v1299
    %v1963 = vunpack.c.h.b16 %v1299
    %v1964 = vunpack.c.l.b16 %v1300
    %v1965 = vunpack.c.h.b16 %v1300
    %v1966 = vunpack.c.l.b16 %v1301
    %v1967 = vunpack.c.h.b16 %v1301
    %v1968 = vunpack.c.l.b16 %v1302
    %v1969 = vunpack.c.h.b16 %v1302
    %v1970 = vunpack.c.l.b16 %v1303
    %v1971 = vunpack.c.h.b16 %v1303
    %v1972 = vunpack.c.l.b16 %v1304
    %v1973 = vunpack.c.h.b16 %v1304
    %v1974 = vunpack.c.l.b16 %v1305
    %v1975 = vunpack.c.h.b16 %v1305
    %v1976 = vunpack.c.l.b16 %v1306
    %v1977 = vunpack.c.h.b16 %v1306
    %v1978 = vunpack.c.l.b16 %v1307
    %v1979 = vunpack.c.h.b16 %v1307
    %v1980 = vunpack.c.l.b16 %v1308
    %v1981 = vunpack.c.h.b16 %v1308
    %v1982 = vunpack.c.l.b16 %v1309
    %v1983 = vunpack.c.h.b16 %v1309
    %v1984 = vunpack.c.l.b16 %v1310
    %v1985 = vunpack.c.h.b16 %v1310
    %v1986 = vunpack.c.l.b16 %v1311
    %v1987 = vunpack.c.h.b16 %v1311
    %v1988 = vunpack.c.l.b16 %v1312
    %v1989 = vunpack.c.h.b16 %v1312
    %v1990 = vunpack.c.l.b16 %v1313
    %v1991 = vunpack.c.h.b16 %v1313
    %v1992 = vunpack.c.l.b16 %v1314
    %v1993 = vunpack.c.h.b16 %v1314
    %v1994 = vunpack.c.l.b16 %v1315
    %v1995 = vunpack.c.h.b16 %v1315
    %v1996 = vunpack.c.l.b16 %v1316
    %v1997 = vunpack.c.h.b16 %v1316
    %v1998 = vunpack.c.l.b16 %v1317
    %v1999 = vunpack.c.h.b16 %v1317
    %v2000 = vunpack.c.l.b16 %v1318
    %v2001 = vunpack.c.h.b16 %v1318
    %v2002 = vunpack.c.l.b16 %v1319
    %v2003 = vunpack.c.h.b16 %v1319
    %v2004 = vunpack.c.l.b16 %v1320
    %v2005 = vunpack.c.h.b16 %v1320
    %v2006 = vunpack.c.l.b16 %v1321
    %v2007 = vunpack.c.h.b16 %v1321
    %v2008 = vunpack.c.l.b16 %v1322
    %v2009 = vunpack.c.h.b16 %v1322
    %v2010 = vunpack.c.l.b16 %v1323
    %v2011 = vunpack.c.h.b16 %v1323
    %v2012 = vunpack.c.l.b16 %v1324
    %v2013 = vunpack.c.h.b16 %v1324
    %v2014 = vunpack.c.l.b16 %v1325
    %v2015 = vunpack.c.h.b16 %v1325
    %v2016 = vunpack.c.l.b16 %v1326
    %v2017 = vunpack.c.h.b16 %v1326
    %v2018 = vunpack.c.l.b16 %v1327
    %v2019 = vunpack.c.h.b16 %v1327
    %v2020 = vunpack.c.l.b16 %v1328
    %v2021 = vunpack.c.h.b16 %v1328
    %v2022 = vunpack.c.l.b16 %v1329
    %v2023 = vunpack.c.h.b16 %v1329
    %v2024 = vunpack.c.l.b16 %v1330
    %v2025 = vunpack.c.h.b16 %v1330
    %v2026 = vunpack.c.l.b16 %v1331
    %v2027 = vunpack.c.h.b16 %v1331
    %v2028 = vunpack.c.l.b16 %v1332
    %v2029 = vunpack.c.h.b16 %v1332
    %v2030 = vunpack.c.l.b16 %v1333
    %v2031 = vunpack.c.h.b16 %v1333
    %v2032 = vunpack.c.l.b16 %v1334
    %v2033 = vunpack.c.h.b16 %v1334
    %v2034 = vunpack.c.l.b16 %v1335
    %v2035 = vunpack.c.h.b16 %v1335
    %v2036 = vunpack.c.l.b16 %v1336
    %v2037 = vunpack.c.h.b16 %v1336
    %v2038 = vunpack.c.l.b16 %v1337
    %v2039 = vunpack.c.h.b16 %v1337
    %v2040 = vunpack.c.l.b16 %v1338
    %v2041 = vunpack.c.h.b16 %v1338
    %v2042 = vunpack.c.l.b16 %v1339
    %v2043 = vunpack.c.h.b16 %v1339
    %v2044 = vunpack.c.l.b16 %v1340
    %v2045 = vunpack.c.h.b16 %v1340
    %v2046 = vunpack.c.l.b16 %v1341
    %v2047 = vunpack.c.h.b16 %v1341
    %v2048 = vunpack.c.l.b16 %v1342
    %v2049 = vunpack.c.h.b16 %v1342
    %v2050 = vunpack.c.l.b16 %v1343
    %v2051 = vunpack.c.h.b16 %v1343
    %v2052 = vunpack.c.l.b16 %v1344
    %v2053 = vunpack.c.h.b16 %v1344
    %v2054 = vunpack.c.l.b16 %v1345
    %v2055 = vunpack.c.h.b16 %v1345
    %v2056 = vunpack.c.l.b16 %v1346
    %v2057 = vunpack.c.h.b16 %v1346
    %v2058 = vunpack.c.l.b16 %v1347
    %v2059 = vunpack.c.h.b16 %v1347
    %v2060 = vunpack.c.l.b16 %v1348
    %v2061 = vunpack.c.h.b16 %v1348
    %v2062 = vunpack.c.l.b16 %v1349
    %v2063 = vunpack.c.h.b16 %v1349
    %v2064 = vunpack.c.l.b16 %v1350
    %v2065 = vunpack.c.h.b16 %v1350
    %v2066 = vunpack.c.l.b16 %v1351
    %v2067 = vunpack.c.h.b16 %v1351
    %v2068 = vunpack.c.l.b16 %v1352
    %v2069 = vunpack.c.h.b16 %v1352
    %v2070 = vunpack.c.l.b16 %v1353
    %v2071 = vunpack.c.h.b16 %v1353
    %v2072 = vunpack.c.l.b16 %v1354
    %v2073 = vunpack.c.h.b16 %v1354
    %v2074 = vunpack.c.l.b16 %v1355
    %v2075 = vunpack.c.h.b16 %v1355
    %v2076 = vunpack.c.l.b16 %v1356
    %v2077 = vunpack.c.h.b16 %v1356
    %v2078 = vunpack.c.l.b16 %v1357
    %v2079 = vunpack.c.h.b16 %v1357
    %v2080 = vunpack.c.l.b16 %v1358
    %v2081 = vunpack.c.h.b16 %v1358
    %v2082 = vunpack.c.l.b16 %v1359
    %v2083 = vunpack.c.h.b16 %v1359
    %v2084 = vunpack.c.l.b16 %v1360
    %v2085 = vunpack.c.h.b16 %v1360
    %v2086 = vunpack.c.l.b16 %v1361
    %v2087 = vunpack.c.h.b16 %v1361
    %v2088 = vunpack.c.l.b16 %v1362
    %v2089 = vunpack.c.h.b16 %v1362
    %v2090 = vunpack.c.l.b16 %v1363
    %v2091 = vunpack.c.h.b16 %v1363
    %v2092 = vunpack.c.l.b16 %v1364
    %v2093 = vunpack.c.h.b16 %v1364
    %v2094 = vunpack.c.l.b16 %v1365
    %v2095 = vunpack.c.h.b16 %v1365
    %v2096 = vunpack.c.l.b16 %v1366
    %v2097 = vunpack.c.h.b16 %v1366
    %v2098 = vunpack.c.l.b16 %v1367
    %v2099 = vunpack.c.h.b16 %v1367
    %v2100 = vunpack.c.l.b16 %v1368
    %v2101 = vunpack.c.h.b16 %v1368
    %v2102 = vunpack.c.l.b16 %v1369
    %v2103 = vunpack.c.h.b16 %v1369
    %v2104 = vunpack.c.l.b16 %v1370
    %v2105 = vunpack.c.h.b16 %v1370
    %v2106 = vunpack.c.l.b16 %v1371
    %v2107 = vunpack.c.h.b16 %v1371
    %v2108 = vunpack.c.l.b16 %v1372
    %v2109 = vunpack.c.h.b16 %v1372
    %v2110 = vunpack.c.l.b16 %v1373
    %v2111 = vunpack.c.h.b16 %v1373
    %v2112 = vunpack.c.l.b16 %v1374
    %v2113 = vunpack.c.h.b16 %v1374
    %v2114 = vunpack.c.l.b16 %v1375
    %v2115 = vunpack.c.h.b16 %v1375
    %v2116 = vunpack.c.l.b16 %v1376
    %v2117 = vunpack.c.h.b16 %v1376
    %v2118 = vunpack.c.l.b16 %v1377
    %v2119 = vunpack.c.h.b16 %v1377
    %v2120 = vunpack.c.l.b16 %v1378
    %v2121 = vunpack.c.h.b16 %v1378
    %v2122 = vunpack.c.l.b16 %v1379
    %v2123 = vunpack.c.h.b16 %v1379
    %v2124 = vunpack.c.l.b16 %v1380
    %v2125 = vunpack.c.h.b16 %v1380
    %v2126 = vunpack.c.l.b16 %v1381
    %v2127 = vunpack.c.h.b16 %v1381
    %v2128 = vunpack.c.l.b16 %v1382
    %v2129 = vunpack.c.h.b16 %v1382
    %v2130 = vunpack.c.l.b16 %v1383
    %v2131 = vunpack.c.h.b16 %v1383
    %v2132 = vunpack.c.l.b16 %v1384
    %v2133 = vunpack.c.h.b16 %v1384
    %v2134 = vunpack.c.l.b16 %v1385
    %v2135 = vunpack.c.h.b16 %v1385
    %v2136 = vunpack.c.l.b16 %v1386
    %v2137 = vunpack.c.h.b16 %v1386
    %v2138 = vunpack.c.l.b16 %v1387
    %v2139 = vunpack.c.h.b16 %v1387
    %v2140 = vunpack.c.l.b16 %v1388
    %v2141 = vunpack.c.h.b16 %v1388
    %v2142 = vunpack.c.l.b16 %v1389
    %v2143 = vunpack.c.h.b16 %v1389
    %v2144 = vunpack.c.l.b16 %v1390
    %v2145 = vunpack.c.h.b16 %v1390
    %v2146 = vunpack.c.l.b16 %v1391
    %v2147 = vunpack.c.h.b16 %v1391
    %v2148 = vunpack.c.l.b16 %v1392
    %v2149 = vunpack.c.h.b16 %v1392
    %v2150 = vunpack.c.l.b16 %v1393
    %v2151 = vunpack.c.h.b16 %v1393
    %v2152 = vunpack.c.l.b16 %v1394
    %v2153 = vunpack.c.h.b16 %v1394
    %v2154 = vunpack.c.l.b16 %v1395
    %v2155 = vunpack.c.h.b16 %v1395
    %v2156 = vunpack.c.l.b16 %v1396
    %v2157 = vunpack.c.h.b16 %v1396
    %v2158 = vunpack.c.l.b16 %v1397
    %v2159 = vunpack.c.h.b16 %v1397
    %v2160 = vunpack.c.l.b16 %v1398
    %v2161 = vunpack.c.h.b16 %v1398
    %v2162 = vunpack.c.l.b16 %v1399
    %v2163 = vunpack.c.h.b16 %v1399
    %v2164 = vunpack.c.l.b16 %v1400
    %v2165 = vunpack.c.h.b16 %v1400
    %v2166 = vunpack.c.l.b16 %v1401
    %v2167 = vunpack.c.h.b16 %v1401
    %v2168 = vunpack.c.l.b16 %v1402
    %v2169 = vunpack.c.h.b16 %v1402
    %v2170 = vunpack.c.l.b16 %v1403
    %v2171 = vunpack.c.h.b16 %v1403
    %v2172 = vunpack.c.l.b16 %v1404
    %v2173 = vunpack.c.h.b16 %v1404
    %v2174 = vunpack.c.l.b16 %v1405
    %v2175 = vunpack.c.h.b16 %v1405
    %v2176 = vunpack.c.l.b16 %v1406
    %v2177 = vunpack.c.h.b16 %v1406
    %v2178 = vunpack.c.l.b16 %v1407
    %v2179 = vunpack.c.h.b16 %v1407
    %v2180 = vunpack.c.l.b16 %v1408
    %v2181 = vunpack.c.h.b16 %v1408
    %v2182 = vunpack.c.l.b16 %v1409
    %v2183 = vunpack.c.h.b16 %v1409
    %v2184 = vunpack.c.l.b16 %v1410
    %v2185 = vunpack.c.h.b16 %v1410
    %v2186 = vunpack.c.l.b16 %v1411
    %v2187 = vunpack.c.h.b16 %v1411
    %v2188 = vunpack.c.l.b16 %v1412
    %v2189 = vunpack.c.h.b16 %v1412
    %v2190 = vunpack.c.l.b16 %v1413
    %v2191 = vunpack.c.h.b16 %v1413
    %v2192 = vunpack.c.l.b16 %v1414
    %v2193 = vunpack.c.h.b16 %v1414
    %v2194 = vunpack.c.l.b16 %v1415
    %v2195 = vunpack.c.h.b16 %v1415
    %v2196 = vunpack.c.l.b16 %v1416
    %v2197 = vunpack.c.h.b16 %v1416
    %v2198 = vunpack.c.l.b16 %v1417
    %v2199 = vunpack.c.h.b16 %v1417
    %v2200 = vunpack.c.l.b16 %v1418
    %v2201 = vunpack.c.h.b16 %v1418
    %v2202 = vunpack.c.l.b16 %v1419
    %v2203 = vunpack.c.h.b16 %v1419
    %v2204 = vunpack.c.l.b16 %v1420
    %v2205 = vunpack.c.h.b16 %v1420
    %v2206 = vunpack.c.l.b16 %v1421
    %v2207 = vunpack.c.h.b16 %v1421
    %v2208 = vunpack.c.l.b16 %v1422
    %v2209 = vunpack.c.h.b16 %v1422
    %v2210 = vunpack.c.l.b16 %v1423
    %v2211 = vunpack.c.h.b16 %v1423
    %v2212 = vunpack.c.l.b16 %v1424
    %v2213 = vunpack.c.h.b16 %v1424
    %v2214 = vunpack.c.l.b16 %v1425
    %v2215 = vunpack.c.h.b16 %v1425
    %v2216 = vunpack.c.l.b16 %v1426
    %v2217 = vunpack.c.h.b16 %v1426
    %v2218 = vunpack.c.l.b16 %v1427
    %v2219 = vunpack.c.h.b16 %v1427
    %v2220 = vunpack.c.l.b16 %v1428
    %v2221 = vunpack.c.h.b16 %v1428
    %v2222 = vunpack.c.l.b16 %v1429
    %v2223 = vunpack.c.h.b16 %v1429
    %v2224 = vunpack.c.l.b16 %v1430
    %v2225 = vunpack.c.h.b16 %v1430
    %v2226 = vunpack.c.l.b16 %v1431
    %v2227 = vunpack.c.h.b16 %v1431
    %v2228 = vunpack.c.l.b16 %v1432
    %v2229 = vunpack.c.h.b16 %v1432
    %v2230 = vunpack.c.l.b16 %v1433
    %v2231 = vunpack.c.h.b16 %v1433
    %v2232 = vunpack.c.l.b16 %v1434
    %v2233 = vunpack.c.h.b16 %v1434
    %v2234 = vunpack.c.l.b16 %v1435
    %v2235 = vunpack.c.h.b16 %v1435
    %v2236 = vunpack.c.l.b16 %v1436
    %v2237 = vunpack.c.h.b16 %v1436
    %v2238 = vunpack.c.l.b16 %v1437
    %v2239 = vunpack.c.h.b16 %v1437
    %v2240 = vunpack.c.l.b16 %v1438
    %v2241 = vunpack.c.h.b16 %v1438
    %v2242 = vunpack.c.l.b16 %v1439
    %v2243 = vunpack.c.h.b16 %v1439
    %v2244 = vunpack.c.l.b16 %v1440
    %v2245 = vunpack.c.h.b16 %v1440
    %v2246 = vunpack.c.l.b16 %v1441
    %v2247 = vunpack.c.h.b16 %v1441
    %v2248 = vunpack.c.l.b16 %v1442
    %v2249 = vunpack.c.h.b16 %v1442
    %v2250 = vunpack.c.l.b16 %v1443
    %v2251 = vunpack.c.h.b16 %v1443
    %v2252 = vunpack.c.l.b16 %v1444
    %v2253 = vunpack.c.h.b16 %v1444
    %v2254 = vunpack.c.l.b16 %v1445
    %v2255 = vunpack.c.h.b16 %v1445
    %v2256 = vpack.c.b16 %v1752, %v1744
    %v2257 = vpack.c.b16 %v1753, %v1745
    %v2258 = vpack.c.b16 %v1754, %v1746
    %v2259 = vpack.c.b16 %v1755, %v1747
    %v2260 = vpack.c.b16 %v1756, %v1748
    %v2261 = vpack.c.b16 %v1757, %v1749
    %v2262 = vpack.c.b16 %v1758, %v1750
    %v2263 = vpack.c.b16 %v1759, %v1751
    %v2264 = vpack.c.b16 %v1768, %v1760
    %v2265 = vpack.c.b16 %v1769, %v1761
    %v2266 = vpack.c.b16 %v1770, %v1762
    %v2267 = vpack.c.b16 %v1771, %v1763
    %v2268 = vpack.c.b16 %v1772, %v1764
    %v2269 = vpack.c.b16 %v1773, %v1765
    %v2270 = vpack.c.b16 %v1774, %v1766
    %v2271 = vpack.c.b16 %v1775, %v1767
    %v2272 = vpack.c.b16 %v1784, %v1776
    %v2273 = vpack.c.b16 %v1785, %v1777
    %v2274 = vpack.c.b16 %v1786, %v1778
    %v2275 = vpack.c.b16 %v1787, %v1779
    %v2276 = vpack.c.b16 %v1788, %v1780
    %v2277 = vpack.c.b16 %v1789, %v1781
    %v2278 = vpack.c.b16 %v1790, %v1782
    %v2279 = vpack.c.b16 %v1791, %v1783
    %v2280 = vpack.c.b16 %v1800, %v1792
    %v2281 = vpack.c.b16 %v1801, %v1793
    %v2282 = vpack.c.b16 %v1802, %v1794
    %v2283 = vpack.c.b16 %v1803, %v1795
    %v2284 = vpack.c.b16 %v1804, %v1796
    %v2285 = vpack.c.b16 %v1805, %v1797
    %v2286 = vpack.c.b16 %v1806, %v1798
    %v2287 = vpack.c.b16 %v1807, %v1799
    %v2288 = vpack.c.b16 %v1816, %v1808
    %v2289 = vpack.c.b16 %v1817, %v1809
    %v2290 = vpack.c.b16 %v1818, %v1810
    %v2291 = vpack.c.b16 %v1819, %v1811
    %v2292 = vpack.c.b16 %v1820, %v1812
    %v2293 = vpack.c.b16 %v1821, %v1813
    %v2294 = vpack.c.b16 %v1822, %v1814
    %v2295 = vpack.c.b16 %v1823, %v1815
    %v2296 = vpack.c.b16 %v1832, %v1824
    %v2297 = vpack.c.b16 %v1833, %v1825
    %v2298 = vpack.c.b16 %v1834, %v1826
    %v2299 = vpack.c.b16 %v1835, %v1827
    %v2300 = vpack.c.b16 %v1836, %v1828
    %v2301 = vpack.c.b16 %v1837, %v1829
    %v2302 = vpack.c.b16 %v1838, %v1830
    %v2303 = vpack.c.b16 %v1839, %v1831
    %v2304 = vpack.c.b16 %v1848, %v1840
    %v2305 = vpack.c.b16 %v1849, %v1841
    %v2306 = vpack.c.b16 %v1850, %v1842
    %v2307 = vpack.c.b16 %v1851, %v1843
    %v2308 = vpack.c.b16 %v1852, %v1844
    %v2309 = vpack.c.b16 %v1853, %v1845
    %v2310 = vpack.c.b16 %v1854, %v1846
    %v2311 = vpack.c.b16 %v1855, %v1847
    %v2312 = vpack.c.b16 %v1864, %v1856
    %v2313 = vpack.c.b16 %v1865, %v1857
    %v2314 = vpack.c.b16 %v1866, %v1858
    %v2315 = vpack.c.b16 %v1867, %v1859
    %v2316 = vpack.c.b16 %v1868, %v1860
    %v2317 = vpack.c.b16 %v1869, %v1861
    %v2318 = vpack.c.b16 %v1870, %v1862
    %v2319 = vpack.c.b16 %v1871, %v1863
    %v2320 = vpack.c.b16 %v1880, %v1872
    %v2321 = vpack.c.b16 %v1881, %v1873
    %v2322 = vpack.c.b16 %v1882, %v1874
    %v2323 = vpack.c.b16 %v1883, %v1875
    %v2324 = vpack.c.b16 %v1884, %v1876
    %v2325 = vpack.c.b16 %v1885, %v1877
    %v2326 = vpack.c.b16 %v1886, %v1878
    %v2327 = vpack.c.b16 %v1887, %v1879
    %v2328 = vpack.c.b16 %v1896, %v1888
    %v2329 = vpack.c.b16 %v1897, %v1889
    %v2330 = vpack.c.b16 %v1898, %v1890
    %v2331 = vpack.c.b16 %v1899, %v1891
    %v2332 = vpack.c.b16 %v1900, %v1892
    %v2333 = vpack.c.b16 %v1901, %v1893
    %v2334 = vpack.c.b16 %v1902, %v1894
    %v2335 = vpack.c.b16 %v1903, %v1895
    %v2336 = vpack.c.b16 %v1912, %v1904
    %v2337 = vpack.c.b16 %v1913, %v1905
    %v2338 = vpack.c.b16 %v1914, %v1906
    %v2339 = vpack.c.b16 %v1915, %v1907
    %v2340 = vpack.c.b16 %v1916, %v1908
    %v2341 = vpack.c.b16 %v1917, %v1909
    %v2342 = vpack.c.b16 %v1918, %v1910
    %v2343 = vpack.c.b16 %v1919, %v1911
    %v2344 = vpack.c.b16 %v1928, %v1920
    %v2345 = vpack.c.b16 %v1929, %v1921
    %v2346 = vpack.c.b16 %v1930, %v1922
    %v2347 = vpack.c.b16 %v1931, %v1923
    %v2348 = vpack.c.b16 %v1932, %v1924
    %v2349 = vpack.c.b16 %v1933, %v1925
    %v2350 = vpack.c.b16 %v1934, %v1926
    %v2351 = vpack.c.b16 %v1935, %v1927
    %v2352 = vpack.c.b16 %v1944, %v1936
    %v2353 = vpack.c.b16 %v1945, %v1937
    %v2354 = vpack.c.b16 %v1946, %v1938
    %v2355 = vpack.c.b16 %v1947, %v1939
    %v2356 = vpack.c.b16 %v1948, %v1940
    %v2357 = vpack.c.b16 %v1949, %v1941
    %v2358 = vpack.c.b16 %v1950, %v1942
    %v2359 = vpack.c.b16 %v1951, %v1943
    %v2360 = vpack.c.b16 %v1960, %v1952
    %v2361 = vpack.c.b16 %v1961, %v1953
    %v2362 = vpack.c.b16 %v1962, %v1954
    %v2363 = vpack.c.b16 %v1963, %v1955
    %v2364 = vpack.c.b16 %v1964, %v1956
    %v2365 = vpack.c.b16 %v1965, %v1957
    %v2366 = vpack.c.b16 %v1966, %v1958
    %v2367 = vpack.c.b16 %v1967, %v1959
    %v2368 = vpack.c.b16 %v1976, %v1968
    %v2369 = vpack.c.b16 %v1977, %v1969
    %v2370 = vpack.c.b16 %v1978, %v1970
    %v2371 = vpack.c.b16 %v1979, %v1971
    %v2372 = vpack.c.b16 %v1980, %v1972
    %v2373 = vpack.c.b16 %v1981, %v1973
    %v2374 = vpack.c.b16 %v1982, %v1974
    %v2375 = vpack.c.b16 %v1983, %v1975
    %v2376 = vpack.c.b16 %v1992, %v1984
    %v2377 = vpack.c.b16 %v1993, %v1985
    %v2378 = vpack.c.b16 %v1994, %v1986
    %v2379 = vpack.c.b16 %v1995, %v1987
    %v2380 = vpack.c.b16 %v1996, %v1988
    %v2381 = vpack.c.b16 %v1997, %v1989
    %v2382 = vpack.c.b16 %v1998, %v1990
    %v2383 = vpack.c.b16 %v1999, %v1991
    %v2384 = vpack.c.b16 %v2008, %v2000
    %v2385 = vpack.c.b16 %v2009, %v2001
    %v2386 = vpack.c.b16 %v2010, %v2002
    %v2387 = vpack.c.b16 %v2011, %v2003
    %v2388 = vpack.c.b16 %v2012, %v2004
    %v2389 = vpack.c.b16 %v2013, %v2005
    %v2390 = vpack.c.b16 %v2014, %v2006
    %v2391 = vpack.c.b16 %v2015, %v2007
    %v2392 = vpack.c.b16 %v2024, %v2016
    %v2393 = vpack.c.b16 %v2025, %v2017
    %v2394 = vpack.c.b16 %v2026, %v2018
    %v2395 = vpack.c.b16 %v2027, %v2019
    %v2396 = vpack.c.b16 %v2028, %v2020
    %v2397 = vpack.c.b16 %v2029, %v2021
    %v2398 = vpack.c.b16 %v2030, %v2022
    %v2399 = vpack.c.b16 %v2031, %v2023
    %v2400 = vpack.c.b16 %v2040, %v2032
    %v2401 = vpack.c.b16 %v2041, %v2033
    %v2402 = vpack.c.b16 %v2042, %v2034
    %v2403 = vpack.c.b16 %v2043, %v2035
    %v2404 = vpack.c.b16 %v2044, %v2036
    %v2405 = vpack.c.b16 %v2045, %v2037
    %v2406 = vpack.c.b16 %v2046, %v2038
    %v2407 = vpack.c.b16 %v2047, %v2039
    %v2408 = vpack.c.b16 %v2056, %v2048
    %v2409 = vpack.c.b16 %v2057, %v2049
    %v2410 = vpack.c.b16 %v2058, %v2050
    %v2411 = vpack.c.b16 %v2059, %v2051
    %v2412 = vpack.c.b16 %v2060, %v2052
    %v2413 = vpack.c.b16 %v2061, %v2053
    %v2414 = vpack.c.b16 %v2062, %v2054
    %v2415 = vpack.c.b16 %v2063, %v2055
    %v2416 = vpack.c.b16 %v2072, %v2064
    %v2417 = vpack.c.b16 %v2073, %v2065
    %v2418 = vpack.c.b16 %v2074, %v2066
    %v2419 = vpack.c.b16 %v2075, %v2067
    %v2420 = vpack.c.b16 %v2076, %v2068
    %v2421 = vpack.c.b16 %v2077, %v2069
    %v2422 = vpack.c.b16 %v2078, %v2070
    %v2423 = vpack.c.b16 %v2079, %v2071
    %v2424 = vpack.c.b16 %v2088, %v2080
    %v2425 = vpack.c.b16 %v2089, %v2081
    %v2426 = vpack.c.b16 %v2090, %v2082
    %v2427 = vpack.c.b16 %v2091, %v2083
    %v2428 = vpack.c.b16 %v2092, %v2084
    %v2429 = vpack.c.b16 %v2093, %v2085
    %v2430 = vpack.c.b16 %v2094, %v2086
    %v2431 = vpack.c.b16 %v2095, %v2087
    %v2432 = vpack.c.b16 %v2104, %v2096
    %v2433 = vpack.c.b16 %v2105, %v2097
    %v2434 = vpack.c.b16 %v2106, %v2098
    %v2435 = vpack.c.b16 %v2107, %v2099
    %v2436 = vpack.c.b16 %v2108, %v2100
    %v2437 = vpack.c.b16 %v2109, %v2101
    %v2438 = vpack.c.b16 %v2110, %v2102
    %v2439 = vpack.c.b16 %v2111, %v2103
    %v2440 = vpack.c.b16 %v2120, %v2112
    %v2441 = vpack.c.b16 %v2121, %v2113
    %v2442 = vpack.c.b16 %v2122, %v2114
    %v2443 = vpack.c.b16 %v2123, %v2115
    %v2444 = vpack.c.b16 %v2124, %v2116
    %v2445 = vpack.c.b16 %v2125, %v2117
    %v2446 = vpack.c.b16 %v2126, %v2118
    %v2447 = vpack.c.b16 %v2127, %v2119
    %v2448 = vpack.c.b16 %v2136, %v2128
    %v2449 = vpack.c.b16 %v2137, %v2129
    %v2450 = vpack.c.b16 %v2138, %v2130
    %v2451 = vpack.c.b16 %v2139, %v2131
    %v2452 = vpack.c.b16 %v2140, %v2132
    %v2453 = vpack.c.b16 %v2141, %v2133
    %v2454 = vpack.c.b16 %v2142, %v2134
    %v2455 = vpack.c.b16 %v2143, %v2135
    %v2456 = vpack.c.b16 %v2152, %v2144
    %v2457 = vpack.c.b16 %v2153, %v2145
    %v2458 = vpack.c.b16 %v2154, %v2146
    %v2459 = vpack.c.b16 %v2155, %v2147
    %v2460 = vpack.c.b16 %v2156, %v2148
    %v2461 = vpack.c.b16 %v2157, %v2149
    %v2462 = vpack.c.b16 %v2158, %v2150
    %v2463 = vpack.c.b16 %v2159, %v2151
    %v2464 = vpack.c.b16 %v2168, %v2160
    %v2465 = vpack.c.b16 %v2169, %v2161
    %v2466 = vpack.c.b16 %v2170, %v2162
    %v2467 = vpack.c.b16 %v2171, %v2163
    %v2468 = vpack.c.b16 %v2172, %v2164
    %v2469 = vpack.c.b16 %v2173, %v2165
    %v2470 = vpack.c.b16 %v2174, %v2166
    %v2471 = vpack.c.b16 %v2175, %v2167
    %v2472 = vpack.c.b16 %v2184, %v2176
    %v2473 = vpack.c.b16 %v2185, %v2177
    %v2474 = vpack.c.b16 %v2186, %v2178
    %v2475 = vpack.c.b16 %v2187, %v2179
    %v2476 = vpack.c.b16 %v2188, %v2180
    %v2477 = vpack.c.b16 %v2189, %v2181
    %v2478 = vpack.c.b16 %v2190, %v2182
    %v2479 = vpack.c.b16 %v2191, %v2183
    %v2480 = vpack.c.b16 %v2200, %v2192
    %v2481 = vpack.c.b16 %v2201, %v2193
    %v2482 = vpack.c.b16 %v2202, %v2194
    %v2483 = vpack.c.b16 %v2203, %v2195
    %v2484 = vpack.c.b16 %v2204, %v2196
    %v2485 = vpack.c.b16 %v2205, %v2197
    %v2486 = vpack.c.b16 %v2206, %v2198
    %v2487 = vpack.c.b16 %v2207, %v2199
    %v2488 = vpack.c.b16 %v2216, %v2208
    %v2489 = vpack.c.b16 %v2217, %v2209
    %v2490 = vpack.c.b16 %v2218, %v2210
    %v2491 = vpack.c.b16 %v2219, %v2211
    %v2492 = vpack.c.b16 %v2220, %v2212
    %v2493 = vpack.c.b16 %v2221, %v2213
    %v2494 = vpack.c.b16 %v2222, %v2214
    %v2495 = vpack.c.b16 %v2223, %v2215
    %v2496 = vpack.c.b16 %v2232, %v2224
    %v2497 = vpack.c.b16 %v2233, %v2225
    %v2498 = vpack.c.b16 %v2234, %v2226
    %v2499 = vpack.c.b16 %v2235, %v2227
    %v2500 = vpack.c.b16 %v2236, %v2228
    %v2501 = vpack.c.b16 %v2237, %v2229
    %v2502 = vpack.c.b16 %v2238, %v2230
    %v2503 = vpack.c.b16 %v2239, %v2231
    %v2504 = vpack.c.b16 %v2248, %v2240
    %v2505 = vpack.c.b16 %v2249, %v2241
    %v2506 = vpack.c.b16 %v2250, %v2242
    %v2507 = vpack.c.b16 %v2251, %v2243
    %v2508 = vpack.c.b16 %v2252, %v2244
    %v2509 = vpack.c.b16 %v2253, %v2245
    %v2510 = vpack.c.b16 %v2254, %v2246
    %v2511 = vpack.c.b16 %v2255, %v2247
    %2768 = vmatprep.subr.bf16.mxu0 %v2257
    %2769 = vmatpush1.bf16.msra.mxu0 %v2256
    %2770 = vmatprep.subr.bf16.mxu0 %v2265
    %2771 = vmatpush1.bf16.msra.mxu0 %v2264
    %2772 = vmatprep.subr.bf16.mxu0 %v2273
    %2773 = vmatpush1.bf16.msra.mxu0 %v2272
    %2774 = vmatprep.subr.bf16.mxu0 %v2281
    %2775 = vmatpush1.bf16.msra.mxu0 %v2280
    %2776 = vmatprep.subr.bf16.mxu0 %v2289
    %2777 = vmatpush1.bf16.msra.mxu0 %v2288
    %2778 = vmatprep.subr.bf16.mxu0 %v2297
    %2779 = vmatpush1.bf16.msra.mxu0 %v2296
    %2780 = vmatprep.subr.bf16.mxu0 %v2305
    %2781 = vmatpush1.bf16.msra.mxu0 %v2304
    %2782 = vmatprep.subr.bf16.mxu0 %v2313
    %2783 = vmatpush1.bf16.msra.mxu0 %v2312
    %2784 = vmatprep.subr.bf16.mxu0 %v2321
    %2785 = vmatpush1.bf16.msra.mxu0 %v2320
    %2786 = vmatprep.subr.bf16.mxu0 %v2329
    %2787 = vmatpush1.bf16.msra.mxu0 %v2328
    %2788 = vmatprep.subr.bf16.mxu0 %v2337
    %2789 = vmatpush1.bf16.msra.mxu0 %v2336
    %2790 = vmatprep.subr.bf16.mxu0 %v2345
    %2791 = vmatpush1.bf16.msra.mxu0 %v2344
    %2792 = vmatprep.subr.bf16.mxu0 %v2353
    %2793 = vmatpush1.bf16.msra.mxu0 %v2352
    %2794 = vmatprep.subr.bf16.mxu0 %v2361
    %2795 = vmatpush1.bf16.msra.mxu0 %v2360
    %2796 = vmatprep.subr.bf16.mxu0 %v2369
    %2797 = vmatpush1.bf16.msra.mxu0 %v2368
    %2798 = vmatprep.subr.bf16.mxu0 %v2377
    %2799 = vmatpush1.bf16.msra.mxu0 %v2376
    %2800 = vmatprep.mubr.bf16.mxu0 %v1187
    %2801 = vmatmul.mubr.bf16.gmra.mrb[0].mxu0 %v1186
    %v2802 = vpop.f32.mrb[0].mxu0
    %v2803 = vadd.f32 %v1451, %v2802
    %v2804 = vpop.f32.mrb[0].mxu0
    %v2805 = vadd.f32 %v1455, %v2804
    %v2806 = vpop.f32.mrb[0].mxu0
    %v2807 = vpop.f32.mrb[0].mxu0
    %2808 = vdwg.mxu0
    %2809 = vmatprep.subr.bf16.mxu0 %v2385
    %2810 = vmatpush1.bf16.msra.mxu0 %v2384
    %2811 = vmatprep.subr.bf16.mxu0 %v2393
    %2812 = vmatpush1.bf16.msra.mxu0 %v2392
    %2813 = vmatprep.subr.bf16.mxu0 %v2401
    %2814 = vmatpush1.bf16.msra.mxu0 %v2400
    %2815 = vmatprep.subr.bf16.mxu0 %v2409
    %2816 = vmatpush1.bf16.msra.mxu0 %v2408
    %2817 = vmatprep.subr.bf16.mxu0 %v2417
    %2818 = vmatpush1.bf16.msra.mxu0 %v2416
    %2819 = vmatprep.subr.bf16.mxu0 %v2425
    %2820 = vmatpush1.bf16.msra.mxu0 %v2424
    %2821 = vmatprep.subr.bf16.mxu0 %v2433
    %2822 = vmatpush1.bf16.msra.mxu0 %v2432
    %2823 = vmatprep.subr.bf16.mxu0 %v2441
    %2824 = vmatpush1.bf16.msra.mxu0 %v2440
    %2825 = vmatprep.subr.bf16.mxu0 %v2449
    %2826 = vmatpush1.bf16.msra.mxu0 %v2448
    %2827 = vmatprep.subr.bf16.mxu0 %v2457
    %2828 = vmatpush1.bf16.msra.mxu0 %v2456
    %2829 = vmatprep.subr.bf16.mxu0 %v2465
    %2830 = vmatpush1.bf16.msra.mxu0 %v2464
    %2831 = vmatprep.subr.bf16.mxu0 %v2473
    %2832 = vmatpush1.bf16.msra.mxu0 %v2472
    %2833 = vmatprep.subr.bf16.mxu0 %v2481
    %2834 = vmatpush1.bf16.msra.mxu0 %v2480
    %2835 = vmatprep.subr.bf16.mxu0 %v2489
    %2836 = vmatpush1.bf16.msra.mxu0 %v2488
    %2837 = vmatprep.subr.bf16.mxu0 %v2497
    %2838 = vmatpush1.bf16.msra.mxu0 %v2496
    %2839 = vmatprep.subr.bf16.mxu0 %v2505
    %2840 = vmatpush1.bf16.msra.mxu0 %v2504
    %2841 = vmatprep.mubr.bf16.mxu0 %v1189
    %2842 = vmatmul.mubr.bf16.gmra.mrb[0].mxu0 %v1188
    %v2843 = vpop.f32.mrb[0].mxu0
    %v2844 = vadd.f32 %v2803, %v2843
    %v2845 = vpop.f32.mrb[0].mxu0
    %v2846 = vadd.f32 %v2805, %v2845
    %v2847 = vpop.f32.mrb[0].mxu0
    %v2848 = vpop.f32.mrb[0].mxu0
    %2849 = vdwg.mxu0
    %2850 = vmatprep.subr.bf16.mxu0 %v2259
    %2851 = vmatpush1.bf16.msra.mxu0 %v2258
    %2852 = vmatprep.subr.bf16.mxu0 %v2267
    %2853 = vmatpush1.bf16.msra.mxu0 %v2266
    %2854 = vmatprep.subr.bf16.mxu0 %v2275
    %2855 = vmatpush1.bf16.msra.mxu0 %v2274
    %2856 = vmatprep.subr.bf16.mxu0 %v2283
    %2857 = vmatpush1.bf16.msra.mxu0 %v2282
    %2858 = vmatprep.subr.bf16.mxu0 %v2291
    %2859 = vmatpush1.bf16.msra.mxu0 %v2290
    %2860 = vmatprep.subr.bf16.mxu0 %v2299
    %2861 = vmatpush1.bf16.msra.mxu0 %v2298
    %2862 = vmatprep.subr.bf16.mxu0 %v2307
    %2863 = vmatpush1.bf16.msra.mxu0 %v2306
    %2864 = vmatprep.subr.bf16.mxu0 %v2315
    %2865 = vmatpush1.bf16.msra.mxu0 %v2314
    %2866 = vmatprep.subr.bf16.mxu0 %v2323
    %2867 = vmatpush1.bf16.msra.mxu0 %v2322
    %2868 = vmatprep.subr.bf16.mxu0 %v2331
    %2869 = vmatpush1.bf16.msra.mxu0 %v2330
    %2870 = vmatprep.subr.bf16.mxu0 %v2339
    %2871 = vmatpush1.bf16.msra.mxu0 %v2338
    %2872 = vmatprep.subr.bf16.mxu0 %v2347
    %2873 = vmatpush1.bf16.msra.mxu0 %v2346
    %2874 = vmatprep.subr.bf16.mxu0 %v2355
    %2875 = vmatpush1.bf16.msra.mxu0 %v2354
    %2876 = vmatprep.subr.bf16.mxu0 %v2363
    %2877 = vmatpush1.bf16.msra.mxu0 %v2362
    %2878 = vmatprep.subr.bf16.mxu0 %v2371
    %2879 = vmatpush1.bf16.msra.mxu0 %v2370
    %2880 = vmatprep.subr.bf16.mxu0 %v2379
    %2881 = vmatpush1.bf16.msra.mxu0 %v2378
    %2882 = vmatprep.mubr.bf16.mxu0 %v1187
    %2883 = vmatmul.mubr.bf16.gmra.mrb[0].mxu0 %v1186
    %v2884 = vpop.f32.mrb[0].mxu0
    %v2885 = vadd.f32 %v1459, %v2884
    %v2886 = vpop.f32.mrb[0].mxu0
    %v2887 = vadd.f32 %v1463, %v2886
    %v2888 = vpop.f32.mrb[0].mxu0
    %v2889 = vpop.f32.mrb[0].mxu0
    %2890 = vdwg.mxu0
    %2891 = vmatprep.subr.bf16.mxu0 %v2387
    %2892 = vmatpush1.bf16.msra.mxu0 %v2386
    %2893 = vmatprep.subr.bf16.mxu0 %v2395
    %2894 = vmatpush1.bf16.msra.mxu0 %v2394
    %2895 = vmatprep.subr.bf16.mxu0 %v2403
    %2896 = vmatpush1.bf16.msra.mxu0 %v2402
    %2897 = vmatprep.subr.bf16.mxu0 %v2411
    %2898 = vmatpush1.bf16.msra.mxu0 %v2410
    %2899 = vmatprep.subr.bf16.mxu0 %v2419
    %2900 = vmatpush1.bf16.msra.mxu0 %v2418
    %2901 = vmatprep.subr.bf16.mxu0 %v2427
    %2902 = vmatpush1.bf16.msra.mxu0 %v2426
    %2903 = vmatprep.subr.bf16.mxu0 %v2435
    %2904 = vmatpush1.bf16.msra.mxu0 %v2434
    %2905 = vmatprep.subr.bf16.mxu0 %v2443
    %2906 = vmatpush1.bf16.msra.mxu0 %v2442
    %2907 = vmatprep.subr.bf16.mxu0 %v2451
    %2908 = vmatpush1.bf16.msra.mxu0 %v2450
    %2909 = vmatprep.subr.bf16.mxu0 %v2459
    %2910 = vmatpush1.bf16.msra.mxu0 %v2458
    %2911 = vmatprep.subr.bf16.mxu0 %v2467
    %2912 = vmatpush1.bf16.msra.mxu0 %v2466
    %2913 = vmatprep.subr.bf16.mxu0 %v2475
    %2914 = vmatpush1.bf16.msra.mxu0 %v2474
    %2915 = vmatprep.subr.bf16.mxu0 %v2483
    %2916 = vmatpush1.bf16.msra.mxu0 %v2482
    %2917 = vmatprep.subr.bf16.mxu0 %v2491
    %2918 = vmatpush1.bf16.msra.mxu0 %v2490
    %2919 = vmatprep.subr.bf16.mxu0 %v2499
    %2920 = vmatpush1.bf16.msra.mxu0 %v2498
    %2921 = vmatprep.subr.bf16.mxu0 %v2507
    %2922 = vmatpush1.bf16.msra.mxu0 %v2506
    %2923 = vmatprep.mubr.bf16.mxu0 %v1189
    %2924 = vmatmul.mubr.bf16.gmra.mrb[0].mxu0 %v1188
    %v2925 = vpop.f32.mrb[0].mxu0
    %v2926 = vadd.f32 %v2885, %v2925
    %v2927 = vpop.f32.mrb[0].mxu0
    %v2928 = vadd.f32 %v2887, %v2927
    %v2929 = vpop.f32.mrb[0].mxu0
    %v2930 = vpop.f32.mrb[0].mxu0
    %2931 = vdwg.mxu0
    %2932 = vmatprep.subr.bf16.mxu0 %v2261
    %2933 = vmatpush1.bf16.msra.mxu0 %v2260
    %2934 = vmatprep.subr.bf16.mxu0 %v2269
    %2935 = vmatpush1.bf16.msra.mxu0 %v2268
    %2936 = vmatprep.subr.bf16.mxu0 %v2277
    %2937 = vmatpush1.bf16.msra.mxu0 %v2276
    %2938 = vmatprep.subr.bf16.mxu0 %v2285
    %2939 = vmatpush1.bf16.msra.mxu0 %v2284
    %2940 = vmatprep.subr.bf16.mxu0 %v2293
    %2941 = vmatpush1.bf16.msra.mxu0 %v2292
    %2942 = vmatprep.subr.bf16.mxu0 %v2301
    %2943 = vmatpush1.bf16.msra.mxu0 %v2300
    %2944 = vmatprep.subr.bf16.mxu0 %v2309
    %2945 = vmatpush1.bf16.msra.mxu0 %v2308
    %2946 = vmatprep.subr.bf16.mxu0 %v2317
    %2947 = vmatpush1.bf16.msra.mxu0 %v2316
    %2948 = vmatprep.subr.bf16.mxu0 %v2325
    %2949 = vmatpush1.bf16.msra.mxu0 %v2324
    %2950 = vmatprep.subr.bf16.mxu0 %v2333
    %2951 = vmatpush1.bf16.msra.mxu0 %v2332
    %2952 = vmatprep.subr.bf16.mxu0 %v2341
    %2953 = vmatpush1.bf16.msra.mxu0 %v2340
    %2954 = vmatprep.subr.bf16.mxu0 %v2349
    %2955 = vmatpush1.bf16.msra.mxu0 %v2348
    %2956 = vmatprep.subr.bf16.mxu0 %v2357
    %2957 = vmatpush1.bf16.msra.mxu0 %v2356
    %2958 = vmatprep.subr.bf16.mxu0 %v2365
    %2959 = vmatpush1.bf16.msra.mxu0 %v2364
    %2960 = vmatprep.subr.bf16.mxu0 %v2373
    %2961 = vmatpush1.bf16.msra.mxu0 %v2372
    %2962 = vmatprep.subr.bf16.mxu0 %v2381
    %2963 = vmatpush1.bf16.msra.mxu0 %v2380
    %2964 = vmatprep.mubr.bf16.mxu0 %v1187
    %2965 = vmatmul.mubr.bf16.gmra.mrb[0].mxu0 %v1186
    %v2966 = vpop.f32.mrb[0].mxu0
    %v2967 = vadd.f32 %v1467, %v2966
    %v2968 = vpop.f32.mrb[0].mxu0
    %v2969 = vadd.f32 %v1471, %v2968
    %v2970 = vpop.f32.mrb[0].mxu0
    %v2971 = vpop.f32.mrb[0].mxu0
    %2972 = vdwg.mxu0
    %2973 = vmatprep.subr.bf16.mxu0 %v2389
    %2974 = vmatpush1.bf16.msra.mxu0 %v2388
    %2975 = vmatprep.subr.bf16.mxu0 %v2397
    %2976 = vmatpush1.bf16.msra.mxu0 %v2396
    %2977 = vmatprep.subr.bf16.mxu0 %v2405
    %2978 = vmatpush1.bf16.msra.mxu0 %v2404
    %2979 = vmatprep.subr.bf16.mxu0 %v2413
    %2980 = vmatpush1.bf16.msra.mxu0 %v2412
    %2981 = vmatprep.subr.bf16.mxu0 %v2421
    %2982 = vmatpush1.bf16.msra.mxu0 %v2420
    %2983 = vmatprep.subr.bf16.mxu0 %v2429
    %2984 = vmatpush1.bf16.msra.mxu0 %v2428
    %2985 = vmatprep.subr.bf16.mxu0 %v2437
    %2986 = vmatpush1.bf16.msra.mxu0 %v2436
    %2987 = vmatprep.subr.bf16.mxu0 %v2445
    %2988 = vmatpush1.bf16.msra.mxu0 %v2444
    %2989 = vmatprep.subr.bf16.mxu0 %v2453
    %2990 = vmatpush1.bf16.msra.mxu0 %v2452
    %2991 = vmatprep.subr.bf16.mxu0 %v2461
    %2992 = vmatpush1.bf16.msra.mxu0 %v2460
    %2993 = vmatprep.subr.bf16.mxu0 %v2469
    %2994 = vmatpush1.bf16.msra.mxu0 %v2468
    %2995 = vmatprep.subr.bf16.mxu0 %v2477
    %2996 = vmatpush1.bf16.msra.mxu0 %v2476
    %2997 = vmatprep.subr.bf16.mxu0 %v2485
    %2998 = vmatpush1.bf16.msra.mxu0 %v2484
    %2999 = vmatprep.subr.bf16.mxu0 %v2493
    %3000 = vmatpush1.bf16.msra.mxu0 %v2492
    %3001 = vmatprep.subr.bf16.mxu0 %v2501
    %3002 = vmatpush1.bf16.msra.mxu0 %v2500
    %3003 = vmatprep.subr.bf16.mxu0 %v2509
    %3004 = vmatpush1.bf16.msra.mxu0 %v2508
    %3005 = vmatprep.mubr.bf16.mxu0 %v1189
    %3006 = vmatmul.mubr.bf16.gmra.mrb[0].mxu0 %v1188
    %v3007 = vpop.f32.mrb[0].mxu0
    %v3008 = vadd.f32 %v2967, %v3007
    %v3009 = vpop.f32.mrb[0].mxu0
    %v3010 = vadd.f32 %v2969, %v3009
    %v3011 = vpop.f32.mrb[0].mxu0
    %v3012 = vpop.f32.mrb[0].mxu0
    %3013 = vdwg.mxu0
    %3014 = vmatprep.subr.bf16.mxu0 %v2263
    %3015 = vmatpush1.bf16.msra.mxu0 %v2262
    %3016 = vmatprep.subr.bf16.mxu0 %v2271
    %3017 = vmatpush1.bf16.msra.mxu0 %v2270
    %3018 = vmatprep.subr.bf16.mxu0 %v2279
    %3019 = vmatpush1.bf16.msra.mxu0 %v2278
    %3020 = vmatprep.subr.bf16.mxu0 %v2287
    %3021 = vmatpush1.bf16.msra.mxu0 %v2286
    %3022 = vmatprep.subr.bf16.mxu0 %v2295
    %3023 = vmatpush1.bf16.msra.mxu0 %v2294
    %3024 = vmatprep.subr.bf16.mxu0 %v2303
    %3025 = vmatpush1.bf16.msra.mxu0 %v2302
    %3026 = vmatprep.subr.bf16.mxu0 %v2311
    %3027 = vmatpush1.bf16.msra.mxu0 %v2310
    %3028 = vmatprep.subr.bf16.mxu0 %v2319
    %3029 = vmatpush1.bf16.msra.mxu0 %v2318
    %3030 = vmatprep.subr.bf16.mxu0 %v2327
    %3031 = vmatpush1.bf16.msra.mxu0 %v2326
    %3032 = vmatprep.subr.bf16.mxu0 %v2335
    %3033 = vmatpush1.bf16.msra.mxu0 %v2334
    %3034 = vmatprep.subr.bf16.mxu0 %v2343
    %3035 = vmatpush1.bf16.msra.mxu0 %v2342
    %3036 = vmatprep.subr.bf16.mxu0 %v2351
    %3037 = vmatpush1.bf16.msra.mxu0 %v2350
    %3038 = vmatprep.subr.bf16.mxu0 %v2359
    %3039 = vmatpush1.bf16.msra.mxu0 %v2358
    %3040 = vmatprep.subr.bf16.mxu0 %v2367
    %3041 = vmatpush1.bf16.msra.mxu0 %v2366
    %3042 = vmatprep.subr.bf16.mxu0 %v2375
    %3043 = vmatpush1.bf16.msra.mxu0 %v2374
    %3044 = vmatprep.subr.bf16.mxu0 %v2383
    %3045 = vmatpush1.bf16.msra.mxu0 %v2382
    %3046 = vmatprep.mubr.bf16.mxu0 %v1187
    %3047 = vmatmul.mubr.bf16.gmra.mrb[0].mxu0 %v1186
    %v3048 = vpop.f32.mrb[0].mxu0
    %v3049 = vadd.f32 %v1475, %v3048
    %v3050 = vpop.f32.mrb[0].mxu0
    %v3051 = vadd.f32 %v1479, %v3050
    %v3052 = vpop.f32.mrb[0].mxu0
    %v3053 = vpop.f32.mrb[0].mxu0
    %3054 = vdwg.mxu0
    %3055 = vmatprep.subr.bf16.mxu0 %v2391
    %3056 = vmatpush1.bf16.msra.mxu0 %v2390
    %3057 = vmatprep.subr.bf16.mxu0 %v2399
    %3058 = vmatpush1.bf16.msra.mxu0 %v2398
    %3059 = vmatprep.subr.bf16.mxu0 %v2407
    %3060 = vmatpush1.bf16.msra.mxu0 %v2406
    %3061 = vmatprep.subr.bf16.mxu0 %v2415
    %3062 = vmatpush1.bf16.msra.mxu0 %v2414
    %3063 = vmatprep.subr.bf16.mxu0 %v2423
    %3064 = vmatpush1.bf16.msra.mxu0 %v2422
    %3065 = vmatprep.subr.bf16.mxu0 %v2431
    %3066 = vmatpush1.bf16.msra.mxu0 %v2430
    %3067 = vmatprep.subr.bf16.mxu0 %v2439
    %3068 = vmatpush1.bf16.msra.mxu0 %v2438
    %3069 = vmatprep.subr.bf16.mxu0 %v2447
    %3070 = vmatpush1.bf16.msra.mxu0 %v2446
    %3071 = vmatprep.subr.bf16.mxu0 %v2455
    %3072 = vmatpush1.bf16.msra.mxu0 %v2454
    %3073 = vmatprep.subr.bf16.mxu0 %v2463
    %3074 = vmatpush1.bf16.msra.mxu0 %v2462
    %3075 = vmatprep.subr.bf16.mxu0 %v2471
    %3076 = vmatpush1.bf16.msra.mxu0 %v2470
    %3077 = vmatprep.subr.bf16.mxu0 %v2479
    %3078 = vmatpush1.bf16.msra.mxu0 %v2478
    %3079 = vmatprep.subr.bf16.mxu0 %v2487
    %3080 = vmatpush1.bf16.msra.mxu0 %v2486
    %3081 = vmatprep.subr.bf16.mxu0 %v2495
    %3082 = vmatpush1.bf16.msra.mxu0 %v2494
    %3083 = vmatprep.subr.bf16.mxu0 %v2503
    %3084 = vmatpush1.bf16.msra.mxu0 %v2502
    %3085 = vmatprep.subr.bf16.mxu0 %v2511
    %3086 = vmatpush1.bf16.msra.mxu0 %v2510
    %3087 = vmatprep.mubr.bf16.mxu0 %v1189
    %3088 = vmatmul.mubr.bf16.gmra.mrb[0].mxu0 %v1188
    %v3089 = vpop.f32.mrb[0].mxu0
    %v3090 = vadd.f32 %v3049, %v3089
    %v3091 = vpop.f32.mrb[0].mxu0
    %v3092 = vadd.f32 %v3051, %v3091
    %v3093 = vpop.f32.mrb[0].mxu0
    %v3094 = vpop.f32.mrb[0].mxu0
    %3095 = vdwg.mxu0
    %3096 = vst [vmem:[#allocation15] sm:$0xff] %v2844
    %3097 = vst [vmem:[#allocation15 + $0x8] sm:$0xff] %v2846
    %3098 = vst [vmem:[#allocation15 + $0x10] sm:$0xff] %v2926
    %3099 = vst [vmem:[#allocation15 + $0x18] sm:$0xff] %v2928
    %3100 = vst [vmem:[#allocation15 + $0x20] sm:$0xff] %v3008
    %3101 = vst [vmem:[#allocation15 + $0x28] sm:$0xff] %v3010
    %3102 = vst [vmem:[#allocation15 + $0x30] sm:$0xff] %v3090
    %3103 = vst [vmem:[#allocation15 + $0x38] sm:$0xff] %v3092
    // Predicated region
    $region71: #{tpu_custom_call.1} parent=1 // pred_check
      _
    $region72: #{tpu_custom_call.1} parent=1 // pred_check_branch
      %3105 = sbr.rel (0) target = $region74
    $region73: #{tpu_custom_call.1} parent=1 // pred_region
      %s3106 = sadd.s32 0, 0
      %s3108 = ssub.s32 1024, 1024
      %3109 = vsyncadd [#allocation8], %s3108
      %s3110 = smul.addr %s3106, 8
      %s3111 = smul.addr %s3110, 128
      %s3112 = scalar_lea.hbm %s7, %s3111
      %s3114 = sshll.u32 [#allocation15], 4
      %s3115 = int_to_ptr.vmem [resolvable:$true] %s3114
      %3117 = dma.vmem_to_hbm [thread:$0]  %s3115, 1024, %s3112, [#allocation8]
    $region74: #{tpu_custom_call.1} parent=1 // pred_fallthru
      _
    // Predicated region
    $region75: #{tpu_custom_call.1} parent=1 // pred_check
      _
    $region76: #{tpu_custom_call.1} parent=1 // pred_check_branch
      %3119 = sbr.rel (0) target = $region78
    $region77: #{tpu_custom_call.1} parent=1 // pred_region
      %3120 = dma.done [#allocation8], 1024
    $region78: #{tpu_custom_call.1} parent=1 // pred_fallthru
      _
    %3121 = vsyncpa [#allocation7], 1
    %3122 = vsyncpa [#allocation10], 1
    %3123 = vsyncpa [#allocation13], 1
    %3124 = vsyncpa [#allocation8], 1
  %3125 = vsyncmov [#allocation3]
  %s3126 = vpop.sfrf %3125
  %p3127 = scmp.eq.s32.totalorder %s3126, 0
  %p3128 = pneg %p3127
  %3130 = shalt.err (%p3128)
  %s3131 = scalar_lea.sflag [#allocation3], 1
  %3132 = vsyncmov %s3131
  %s3133 = vpop.sfrf %3132
  %p3134 = scmp.eq.s32.totalorder %s3133, 0
  %p3135 = pneg %p3134
  %3137 = shalt.err (%p3135)

</llo_original>
